<compile_context>
chip_gen: v6e
topology: v6e:2x2x1
jax: 0.10.0
libtpu: 0.0.40
codegen_flags: <defaults>
</compile_context>

<pallas_src>
import jax
import jax.numpy as jnp
from jax.experimental import pallas as pl
from jax.experimental.pallas import tpu as pltpu

INPUT_SIZE = 3 * 32 * 32   # 3072
HIDDEN = 256
OUTPUT = 10
OUT_PAD = 128              # lane-dense padded fc3 / output width
TM_MAX = 512               # batch-tile cap (sweet spot of the tile-size sweep)
NEG = -1e30                # "minus infinity" bias for padded logit columns


def mlp_kernel(x_ref, w1_ref, b1_ref, w2_ref, b2_ref, w3_ref, b3_ref, o_ref):
    # in-kernel f32 -> bf16 cast (VPU; free under the memory-bound regime)
    x = x_ref[...].astype(jnp.bfloat16)
    # fc1 + relu  (bf16 operands, f32 MXU accumulation)
    h1 = jnp.dot(x, w1_ref[...], preferred_element_type=jnp.float32)
    h1 = jnp.maximum(h1 + b1_ref[...], 0.0)
    # fc2 + relu
    h2 = jnp.dot(h1.astype(jnp.bfloat16), w2_ref[...],
                 preferred_element_type=jnp.float32)
    h2 = jnp.maximum(h2 + b2_ref[...], 0.0)
    # fc3 (padded to 128 lanes; padded columns carry a -1e30 bias)
    logits = jnp.dot(h2.astype(jnp.bfloat16), w3_ref[...],
                     preferred_element_type=jnp.float32)
    logits = logits + b3_ref[...]
    # numerically stable log_softmax over the padded last dim; pad columns
    # contribute exp(-1e30 - m) == 0, so the 10 real columns are exact.
    m = jnp.max(logits, axis=-1, keepdims=True)
    shifted = logits - m
    lse = jnp.log(jnp.sum(jnp.exp(shifted), axis=-1, keepdims=True))
    o_ref[...] = shifted - lse


def _round_up(n, m):
    return -(-n // m) * m


def _choose_tile(batch):
    """Batch tile: single block for small batches, else <=512 rows with >=2
    grid steps so both v7x TensorCores are used (no-op on v5e/v6e)."""
    if batch <= TM_MAX:
        return _round_up(max(batch, 8), 8)
    return min(TM_MAX, _round_up(_round_up(batch, 2) // 2, 256))


def mlp_forward(xb, params):
    """xb: (B, 3, 32, 32) float32 (NCHW, like torch). Returns (B, 10) f32 log-probs."""
    w1, b1, w2, b2, w3, b3 = params
    x = xb.reshape(-1, INPUT_SIZE)          # same row layout as torch .view; stays f32
    B = x.shape[0]

    tm = _choose_tile(B)
    if tm > B:
        # Only tiny batches (< 8 rows or not a multiple of 8) get padded, and
        # only up to one sublane group -- no full extra HBM pass for real batches.
        x = jnp.pad(x, ((0, tm - B), (0, 0)))
    rows = x.shape[0]
    grid = (pl.cdiv(rows, tm),)             # ragged last block allowed; extra rows sliced off

    # Pad fc3 to 128 output lanes; pad-bias = -1e30 keeps log_softmax exact on
    # the 10 real columns.
    w3p = jnp.zeros((HIDDEN, OUT_PAD), w3.dtype).at[:, :OUTPUT].set(w3)
    b3p = jnp.full((1, OUT_PAD), NEG, jnp.float32).at[:, :OUTPUT].set(b3)

    const = lambda i: (0, 0)                # weights/biases resident across batch tiles

    weight_bytes = ((w1.size + w2.size + w3p.size) * 2
                    + (b1.size + b2.size + b3p.size) * 4)
    # Working-set estimate: double-buffered f32 x/out tiles, (double-buffered)
    # resident weights, f32 intermediates; +25% and +4 MiB headroom.
    vmem_est = (2 * tm * INPUT_SIZE * 4
                + 2 * tm * OUT_PAD * 4
                + 2 * weight_bytes
                + tm * (2 * HIDDEN + 2 * OUT_PAD) * 4)
    vmem_limit = int(vmem_est * 1.25) + (4 << 20)   # ~27 MiB at TM=512: fits all gens

    rows_proc = grid[0] * tm
    cost = pl.CostEstimate(
        flops=2 * rows_proc * (INPUT_SIZE * HIDDEN + HIDDEN * HIDDEN + HIDDEN * OUT_PAD),
        transcendentals=rows_proc * (OUT_PAD + 1),
        bytes_accessed=(rows * INPUT_SIZE * 4 + weight_bytes + rows * OUT_PAD * 4),
    )

    out = pl.pallas_call(
        mlp_kernel,
        out_shape=jax.ShapeDtypeStruct((rows, OUT_PAD), jnp.float32),
        grid=grid,
        in_specs=[
            pl.BlockSpec((tm, INPUT_SIZE), lambda i: (i, 0)),   # x tile (f32)
            pl.BlockSpec((INPUT_SIZE, HIDDEN), const),          # w1 (bf16)
            pl.BlockSpec((1, HIDDEN), const),                   # b1 (f32)
            pl.BlockSpec((HIDDEN, HIDDEN), const),              # w2 (bf16)
            pl.BlockSpec((1, HIDDEN), const),                   # b2 (f32)
            pl.BlockSpec((HIDDEN, OUT_PAD), const),             # w3 padded (bf16)
            pl.BlockSpec((1, OUT_PAD), const),                  # b3 padded (f32)
        ],
        out_specs=pl.BlockSpec((tm, OUT_PAD), lambda i: (i, 0)),
        compiler_params=pltpu.CompilerParams(
            dimension_semantics=("parallel",),
            vmem_limit_bytes=vmem_limit),
        cost_estimate=cost,
    )(x, w1, b1, w2, b2, w3p, b3p)

    return out[:B, :OUTPUT]


def init_params(key):
    """Deterministic init mimicking nn.Linear default (uniform +- 1/sqrt(fan_in)).
    Weights stored (in_features, out_features) in bf16; biases kept in f32."""
    ks = jax.random.split(key, 6)

    def linear(kw, kb, fan_in, fan_out):
        bound = 1.0 / jnp.sqrt(fan_in)
        w = jax.random.uniform(kw, (fan_in, fan_out), jnp.float32, -bound, bound)
        b = jax.random.uniform(kb, (1, fan_out), jnp.float32, -bound, bound)
        return w.astype(jnp.bfloat16), b

    w1, b1 = linear(ks[0], ks[1], INPUT_SIZE, HIDDEN)
    w2, b2 = linear(ks[2], ks[3], HIDDEN, HIDDEN)
    w3, b3 = linear(ks[4], ks[5], HIDDEN, OUTPUT)
    return (w1, b1, w2, b2, w3, b3)


if __name__ == "__main__":
    key = jax.random.PRNGKey(0)
    kx, kp = jax.random.split(key)

    # Small batch of CIFAR-like NCHW inputs (spatial dims fixed by input_size).
    xb = jax.random.normal(kx, (8, 3, 32, 32), jnp.float32)
    params = init_params(kp)

    out = mlp_forward(xb, params)
    out = jax.block_until_ready(out)

    # sanity: shape and log_softmax rows summing to ~1 in prob space
    assert out.shape == (8, OUTPUT)
    row_sums = jnp.sum(jnp.exp(out), axis=-1)
    assert bool(jnp.all(jnp.abs(row_sums - 1.0) < 1e-3))
    assert bool(jnp.all(jnp.isfinite(out)))

    print("KERNEL_OK")
</pallas_src>

<mosaic_0001>
module attributes {stable_mosaic.version = 11 : i64} {
  func.func @mlp_kernel(%arg0: i32, %arg1: memref<8x3072xf32, #tpu.memory_space<vmem>>, %arg2: memref<3072x256xbf16, #tpu.memory_space<vmem>>, %arg3: memref<1x256xf32, #tpu.memory_space<vmem>>, %arg4: memref<256x256xbf16, #tpu.memory_space<vmem>>, %arg5: memref<1x256xf32, #tpu.memory_space<vmem>>, %arg6: memref<256x128xbf16, #tpu.memory_space<vmem>>, %arg7: memref<1x128xf32, #tpu.memory_space<vmem>>, %arg8: memref<8x128xf32, #tpu.memory_space<vmem>>) attributes {dimension_semantics = [#tpu.dimension_semantics<parallel>], iteration_bounds = array<i64: 1>, scalar_prefetch = 0 : i64, scratch_operands = 0 : i64, tpu.core_type = #tpu.core_type<tc>, window_params = [{transform_indices = @transform_0, window_bounds = array<i64: 8, 3072>}, {pipeline_mode = #tpu.pipeline_mode<synchronous>, transform_indices = @transform_1, window_bounds = array<i64: 3072, 256>}, {pipeline_mode = #tpu.pipeline_mode<synchronous>, transform_indices = @transform_2, window_bounds = array<i64: 1, 256>}, {pipeline_mode = #tpu.pipeline_mode<synchronous>, transform_indices = @transform_3, window_bounds = array<i64: 256, 256>}, {pipeline_mode = #tpu.pipeline_mode<synchronous>, transform_indices = @transform_4, window_bounds = array<i64: 1, 256>}, {pipeline_mode = #tpu.pipeline_mode<synchronous>, transform_indices = @transform_5, window_bounds = array<i64: 256, 128>}, {pipeline_mode = #tpu.pipeline_mode<synchronous>, transform_indices = @transform_6, window_bounds = array<i64: 1, 128>}, {transform_indices = @transform_7, window_bounds = array<i64: 8, 128>}]} {
    %c0 = arith.constant 0 : index
    %c0_0 = arith.constant 0 : index
    %0 = vector.load %arg1[%c0, %c0_0] : memref<8x3072xf32, #tpu.memory_space<vmem>>, vector<8x3072xf32>
    %1 = arith.truncf %0 : vector<8x3072xf32> to vector<8x3072xbf16>
    %c0_1 = arith.constant 0 : index
    %c0_2 = arith.constant 0 : index
    %2 = vector.load %arg2[%c0_1, %c0_2] : memref<3072x256xbf16, #tpu.memory_space<vmem>>, vector<3072x256xbf16>
    %cst = arith.constant dense<0.000000e+00> : vector<8x256xf32>
    %3 = tpu.matmul %1, %2, %cst {dimension_numbers = #tpu.dot_dimension_numbers<[1], [0], [0], [1], [0, 0, 1, 1], [], []>} : vector<8x3072xbf16>, vector<3072x256xbf16>, vector<8x256xf32> -> vector<8x256xf32>
    %c0_3 = arith.constant 0 : index
    %c0_4 = arith.constant 0 : index
    %4 = vector.load %arg3[%c0_3, %c0_4] : memref<1x256xf32, #tpu.memory_space<vmem>>, vector<1x256xf32>
    %5 = vector.broadcast %4 : vector<1x256xf32> to vector<8x256xf32>
    %6 = arith.addf %3, %5 : vector<8x256xf32>
    %cst_5 = arith.constant 0.000000e+00 : f32
    %7 = vector.broadcast %cst_5 : f32 to vector<8x256xf32>
    %8 = arith.maximumf %6, %7 : vector<8x256xf32>
    %9 = arith.truncf %8 : vector<8x256xf32> to vector<8x256xbf16>
    %c0_6 = arith.constant 0 : index
    %c0_7 = arith.constant 0 : index
    %10 = vector.load %arg4[%c0_6, %c0_7] : memref<256x256xbf16, #tpu.memory_space<vmem>>, vector<256x256xbf16>
    %cst_8 = arith.constant dense<0.000000e+00> : vector<8x256xf32>
    %11 = tpu.matmul %9, %10, %cst_8 {dimension_numbers = #tpu.dot_dimension_numbers<[1], [0], [0], [1], [0, 0, 1, 1], [], []>} : vector<8x256xbf16>, vector<256x256xbf16>, vector<8x256xf32> -> vector<8x256xf32>
    %c0_9 = arith.constant 0 : index
    %c0_10 = arith.constant 0 : index
    %12 = vector.load %arg5[%c0_9, %c0_10] : memref<1x256xf32, #tpu.memory_space<vmem>>, vector<1x256xf32>
    %13 = vector.broadcast %12 : vector<1x256xf32> to vector<8x256xf32>
    %14 = arith.addf %11, %13 : vector<8x256xf32>
    %cst_11 = arith.constant 0.000000e+00 : f32
    %15 = vector.broadcast %cst_11 : f32 to vector<8x256xf32>
    %16 = arith.maximumf %14, %15 : vector<8x256xf32>
    %17 = arith.truncf %16 : vector<8x256xf32> to vector<8x256xbf16>
    %c0_12 = arith.constant 0 : index
    %c0_13 = arith.constant 0 : index
    %18 = vector.load %arg6[%c0_12, %c0_13] : memref<256x128xbf16, #tpu.memory_space<vmem>>, vector<256x128xbf16>
    %cst_14 = arith.constant dense<0.000000e+00> : vector<8x128xf32>
    %19 = tpu.matmul %17, %18, %cst_14 {dimension_numbers = #tpu.dot_dimension_numbers<[1], [0], [0], [1], [0, 0, 1, 1], [], []>} : vector<8x256xbf16>, vector<256x128xbf16>, vector<8x128xf32> -> vector<8x128xf32>
    %c0_15 = arith.constant 0 : index
    %c0_16 = arith.constant 0 : index
    %20 = vector.load %arg7[%c0_15, %c0_16] : memref<1x128xf32, #tpu.memory_space<vmem>>, vector<1x128xf32>
    %21 = vector.broadcast %20 : vector<1x128xf32> to vector<8x128xf32>
    %22 = arith.addf %19, %21 : vector<8x128xf32>
    %cst_17 = arith.constant dense<0xFF800000> : vector<8xf32>
    %23 = vector.multi_reduction <maximumf>, %22, %cst_17 [1] : vector<8x128xf32> to vector<8xf32>
    %24 = vector.shape_cast %23 : vector<8xf32> to vector<8x1xf32>
    %25 = vector.broadcast %24 : vector<8x1xf32> to vector<8x128xf32>
    %26 = arith.subf %22, %25 : vector<8x128xf32>
    %27 = math.exp %26 : vector<8x128xf32>
    %cst_18 = arith.constant dense<0.000000e+00> : vector<8xf32>
    %28 = vector.multi_reduction <add>, %27, %cst_18 [1] : vector<8x128xf32> to vector<8xf32>
    %29 = vector.shape_cast %28 : vector<8xf32> to vector<8x1xf32>
    %30 = math.log %29 : vector<8x1xf32>
    %31 = vector.broadcast %30 : vector<8x1xf32> to vector<8x128xf32>
    %32 = arith.subf %26, %31 : vector<8x128xf32>
    %c0_19 = arith.constant 0 : index
    %c0_20 = arith.constant 0 : index
    %33 = vector.load %arg8[%c0_19, %c0_20] : memref<8x128xf32, #tpu.memory_space<vmem>>, vector<8x128xf32>
    tpu.vector_store %arg8[%c0_19, %c0_20], %32 {strides = array<i32>} : memref<8x128xf32, #tpu.memory_space<vmem>>, vector<8x128xf32>,
    return
  }
  func.func @transform_0(%arg0: i32) -> (i32, i32) {
    %c0_i32 = arith.constant 0 : i32
    %c0_i32_0 = arith.constant 0 : i32
    return %arg0, %c0_i32 : i32, i32
  }
  func.func @transform_1(%arg0: i32) -> (i32, i32) {
    %c0_i32 = arith.constant 0 : i32
    %c0_i32_0 = arith.constant 0 : i32
    %c0_i32_1 = arith.constant 0 : i32
    return %c0_i32, %c0_i32_0 : i32, i32
  }
  func.func @transform_2(%arg0: i32) -> (i32, i32) {
    %c0_i32 = arith.constant 0 : i32
    %c0_i32_0 = arith.constant 0 : i32
    %c0_i32_1 = arith.constant 0 : i32
    return %c0_i32, %c0_i32_0 : i32, i32
  }
  func.func @transform_3(%arg0: i32) -> (i32, i32) {
    %c0_i32 = arith.constant 0 : i32
    %c0_i32_0 = arith.constant 0 : i32
    %c0_i32_1 = arith.constant 0 : i32
    return %c0_i32, %c0_i32_0 : i32, i32
  }
  func.func @transform_4(%arg0: i32) -> (i32, i32) {
    %c0_i32 = arith.constant 0 : i32
    %c0_i32_0 = arith.constant 0 : i32
    %c0_i32_1 = arith.constant 0 : i32
    return %c0_i32, %c0_i32_0 : i32, i32
  }
  func.func @transform_5(%arg0: i32) -> (i32, i32) {
    %c0_i32 = arith.constant 0 : i32
    %c0_i32_0 = arith.constant 0 : i32
    %c0_i32_1 = arith.constant 0 : i32
    return %c0_i32, %c0_i32_0 : i32, i32
  }
  func.func @transform_6(%arg0: i32) -> (i32, i32) {
    %c0_i32 = arith.constant 0 : i32
    %c0_i32_0 = arith.constant 0 : i32
    %c0_i32_1 = arith.constant 0 : i32
    return %c0_i32, %c0_i32_0 : i32, i32
  }
  func.func @transform_7(%arg0: i32) -> (i32, i32) {
    %c0_i32 = arith.constant 0 : i32
    %c0_i32_0 = arith.constant 0 : i32
    return %arg0, %c0_i32 : i32, i32
  }
}

</mosaic_0001>

<llo_original>
// kernel: tpu_custom_call.1
$region0: #{tpu_custom_call.1}
  #allocation0 [shape = 'u32[]', space=smem, size = 0x4, offset = 0x4, fixed_abs, tag = 'smem constant byte address 0x4 - core index']
  #allocation1 [shape = 'u32[144,128]{1,0:T(1,128)}', space=vmem, size = 0x12000, scoped, tag = 'internal scratch']
  %s0 = inlined_call_operand.hbm [shape: f32[8,3072], index: 0, kind: input, shape index: {}]
  %s1 = inlined_call_operand.hbm [shape: bf16[3072,256], index: 1, kind: input, shape index: {}]
  %s2 = inlined_call_operand.hbm [shape: f32[1,256], index: 2, kind: input, shape index: {}]
  %s3 = inlined_call_operand.hbm [shape: bf16[256,256], index: 3, kind: input, shape index: {}]
  %s4 = inlined_call_operand.hbm [shape: f32[1,256], index: 4, kind: input, shape index: {}]
  %s5 = inlined_call_operand.hbm [shape: bf16[256,128], index: 5, kind: input, shape index: {}]
  %s6 = inlined_call_operand.hbm [shape: f32[1,128], index: 6, kind: input, shape index: {}]
  %s7 = inlined_call_operand.hbm [shape: f32[8,128], index: 7, kind: output, shape index: {}]
  %s8 = sld [smem:[#allocation0]]
  $region66: #{tpu_custom_call.1} parent=0
    _
  %s10 = ssub.s32 1, %s8
  %s11 = scalar_select 0, %s10, %s8
  $region1: #{tpu_custom_call.1} parent=0
    #allocation2 [shape = 'u8[98304]{0}', space=vmem, size = 0x18000, scoped, tag = 'input window, operand 0, single buffered']
    #allocation3 [shape = 's32[1]{0}', space=sflag, size = 0x4, scoped, tag = 'scoped memory for tpu_custom_call.1']
    #allocation4 [shape = 's32[1]{0}', space=sflag, size = 0x4, scoped, tag = 'scoped memory for tpu_custom_call.1']
    #allocation5 [shape = 'u8[1572864]{0}', space=vmem, size = 0x180000, scoped, tag = 'input window, operand 1, single buffered']
    #allocation6 [shape = 's32[1]{0}', space=sflag, size = 0x4, scoped, tag = 'scoped memory for tpu_custom_call.1']
    #allocation7 [shape = 'u8[1024]{0}', space=vmem, size = 0x400, scoped, tag = 'input window, operand 2, single buffered']
    #allocation8 [shape = 'u8[131072]{0}', space=vmem, size = 0x20000, scoped, tag = 'input window, operand 3, single buffered']
    #allocation9 [shape = 's32[1]{0}', space=sflag, size = 0x4, scoped, tag = 'scoped memory for tpu_custom_call.1']
    #allocation10 [shape = 'u8[1024]{0}', space=vmem, size = 0x400, scoped, tag = 'input window, operand 4, single buffered']
    #allocation11 [shape = 'u8[65536]{0}', space=vmem, size = 0x10000, scoped, tag = 'input window, operand 5, single buffered']
    #allocation12 [shape = 's32[1]{0}', space=sflag, size = 0x4, scoped, tag = 'scoped memory for tpu_custom_call.1']
    #allocation13 [shape = 'u8[512]{0}', space=vmem, size = 0x400, scoped, tag = 'input window, operand 6, single buffered']
    #allocation14 [shape = 'u8[4096]{0}', space=vmem, size = 0x1000, scoped, tag = 'output window, operand 0, single buffered']
    %12 = vsyncpa [#allocation3], 0
    %13 = vsyncpa [#allocation6], 0
    %14 = vsyncpa [#allocation9], 0
    %15 = vsyncpa [#allocation12], 0
    %16 = vsyncpa [#allocation4], 0
    // Predicated region
    $region2: #{tpu_custom_call.1} parent=1 // pred_check
      _
    $region3: #{tpu_custom_call.1} parent=1 // pred_check_branch
      %18 = sbr.rel (0) target = $region5
    $region4: #{tpu_custom_call.1} parent=1 // pred_region
      %s20 = ssub.s32 3072, 3072
      %21 = vsyncadd [#allocation3], %s20
      %s23 = sshll.u32 [#allocation2], 4
      %s24 = int_to_ptr.vmem [resolvable:$true] %s23
      %26 = dma.hbm_to_vmem [thread:$0]  %s0, 3072, %s24, [#allocation3]
    $region5: #{tpu_custom_call.1} parent=1 // pred_fallthru
      _
    // Predicated region
    $region6: #{tpu_custom_call.1} parent=1 // pred_check
      _
    $region7: #{tpu_custom_call.1} parent=1 // pred_check_branch
      %28 = sbr.rel (0) target = $region9
    $region8: #{tpu_custom_call.1} parent=1 // pred_region
      %s30 = ssub.s32 49152, 49152
      %31 = vsyncadd [#allocation6], %s30
      %s32 = sshll.u32 [#allocation5], 4
      %s33 = int_to_ptr.vmem [resolvable:$true] %s32
      %38 = dma.hbm_to_vmem [thread:$0]  %s1, 49152, %s33, [#allocation6], 128, 128, 8
    $region9: #{tpu_custom_call.1} parent=1 // pred_fallthru
      _
    // Predicated region
    $region10: #{tpu_custom_call.1} parent=1 // pred_check
      _
    $region11: #{tpu_custom_call.1} parent=1 // pred_check_branch
      %40 = sbr.rel (0) target = $region13
    $region12: #{tpu_custom_call.1} parent=1 // pred_region
      %s42 = ssub.s32 32, 32
      %43 = vsyncadd [#allocation6], %s42
      %s45 = sshll.u32 [#allocation7], 4
      %s46 = int_to_ptr.vmem [resolvable:$true] %s45
      %48 = dma.hbm_to_vmem [thread:$0]  %s2, 32, %s46, [#allocation6]
    $region13: #{tpu_custom_call.1} parent=1 // pred_fallthru
      _
    // Predicated region
    $region14: #{tpu_custom_call.1} parent=1 // pred_check
      _
    $region15: #{tpu_custom_call.1} parent=1 // pred_check_branch
      %50 = sbr.rel (0) target = $region17
    $region16: #{tpu_custom_call.1} parent=1 // pred_region
      %s52 = ssub.s32 4096, 4096
      %53 = vsyncadd [#allocation9], %s52
      %s54 = sshll.u32 [#allocation8], 4
      %s55 = int_to_ptr.vmem [resolvable:$true] %s54
      %60 = dma.hbm_to_vmem [thread:$0]  %s3, 4096, %s55, [#allocation9], 128, 128, 8
    $region17: #{tpu_custom_call.1} parent=1 // pred_fallthru
      _
    // Predicated region
    $region18: #{tpu_custom_call.1} parent=1 // pred_check
      _
    $region19: #{tpu_custom_call.1} parent=1 // pred_check_branch
      %62 = sbr.rel (0) target = $region21
    $region20: #{tpu_custom_call.1} parent=1 // pred_region
      %s64 = ssub.s32 32, 32
      %65 = vsyncadd [#allocation9], %s64
      %s67 = sshll.u32 [#allocation10], 4
      %s68 = int_to_ptr.vmem [resolvable:$true] %s67
      %70 = dma.hbm_to_vmem [thread:$0]  %s4, 32, %s68, [#allocation9]
    $region21: #{tpu_custom_call.1} parent=1 // pred_fallthru
      _
    // Predicated region
    $region22: #{tpu_custom_call.1} parent=1 // pred_check
      _
    $region23: #{tpu_custom_call.1} parent=1 // pred_check_branch
      %72 = sbr.rel (0) target = $region25
    $region24: #{tpu_custom_call.1} parent=1 // pred_region
      %s74 = ssub.s32 2048, 2048
      %75 = vsyncadd [#allocation12], %s74
      %s76 = sshll.u32 [#allocation11], 4
      %s77 = int_to_ptr.vmem [resolvable:$true] %s76
      %82 = dma.hbm_to_vmem [thread:$0]  %s5, 2048, %s77, [#allocation12], 64, 64, 4
    $region25: #{tpu_custom_call.1} parent=1 // pred_fallthru
      _
    // Predicated region
    $region26: #{tpu_custom_call.1} parent=1 // pred_check
      _
    $region27: #{tpu_custom_call.1} parent=1 // pred_check_branch
      %84 = sbr.rel (0) target = $region29
    $region28: #{tpu_custom_call.1} parent=1 // pred_region
      %s86 = ssub.s32 16, 16
      %87 = vsyncadd [#allocation12], %s86
      %s89 = sshll.u32 [#allocation13], 4
      %s90 = int_to_ptr.vmem [resolvable:$true] %s89
      %92 = dma.hbm_to_vmem [thread:$0]  %s6, 16, %s90, [#allocation12]
    $region29: #{tpu_custom_call.1} parent=1 // pred_fallthru
      _
    // Predicated region
    $region30: #{tpu_custom_call.1} parent=1 // pred_check
      _
    $region31: #{tpu_custom_call.1} parent=1 // pred_check_branch
      %94 = sbr.rel (0) target = $region33
    $region32: #{tpu_custom_call.1} parent=1 // pred_region
      %95 = dma.done [#allocation3], 3072
    $region33: #{tpu_custom_call.1} parent=1 // pred_fallthru
      _
    // Predicated region
    $region34: #{tpu_custom_call.1} parent=1 // pred_check
      _
    $region35: #{tpu_custom_call.1} parent=1 // pred_check_branch
      %97 = sbr.rel (0) target = $region37
    $region36: #{tpu_custom_call.1} parent=1 // pred_region
      %98 = dma.done [#allocation6], 49152
    $region37: #{tpu_custom_call.1} parent=1 // pred_fallthru
      _
    // Predicated region
    $region38: #{tpu_custom_call.1} parent=1 // pred_check
      _
    $region39: #{tpu_custom_call.1} parent=1 // pred_check_branch
      %100 = sbr.rel (0) target = $region41
    $region40: #{tpu_custom_call.1} parent=1 // pred_region
      %101 = dma.done [#allocation6], 32
    $region41: #{tpu_custom_call.1} parent=1 // pred_fallthru
      _
    // Predicated region
    $region42: #{tpu_custom_call.1} parent=1 // pred_check
      _
    $region43: #{tpu_custom_call.1} parent=1 // pred_check_branch
      %103 = sbr.rel (0) target = $region45
    $region44: #{tpu_custom_call.1} parent=1 // pred_region
      %104 = dma.done [#allocation9], 4096
    $region45: #{tpu_custom_call.1} parent=1 // pred_fallthru
      _
    // Predicated region
    $region46: #{tpu_custom_call.1} parent=1 // pred_check
      _
    $region47: #{tpu_custom_call.1} parent=1 // pred_check_branch
      %106 = sbr.rel (0) target = $region49
    $region48: #{tpu_custom_call.1} parent=1 // pred_region
      %107 = dma.done [#allocation9], 32
    $region49: #{tpu_custom_call.1} parent=1 // pred_fallthru
      _
    // Predicated region
    $region50: #{tpu_custom_call.1} parent=1 // pred_check
      _
    $region51: #{tpu_custom_call.1} parent=1 // pred_check_branch
      %109 = sbr.rel (0) target = $region53
    $region52: #{tpu_custom_call.1} parent=1 // pred_region
      %110 = dma.done [#allocation12], 2048
    $region53: #{tpu_custom_call.1} parent=1 // pred_fallthru
      _
    // Predicated region
    $region54: #{tpu_custom_call.1} parent=1 // pred_check
      _
    $region55: #{tpu_custom_call.1} parent=1 // pred_check_branch
      %112 = sbr.rel (0) target = $region57
    $region56: #{tpu_custom_call.1} parent=1 // pred_region
      %113 = dma.done [#allocation12], 16
    $region57: #{tpu_custom_call.1} parent=1 // pred_fallthru
      _
    %v115 = vld [vmem:[#allocation2] sm:$0xff]
    %v116 = vld [vmem:[#allocation2 + $0x8] sm:$0xff]
    %v117 = vld [vmem:[#allocation2 + $0x10] sm:$0xff]
    %v118 = vld [vmem:[#allocation2 + $0x18] sm:$0xff]
    %v119 = vld [vmem:[#allocation2 + $0x20] sm:$0xff]
    %v120 = vld [vmem:[#allocation2 + $0x28] sm:$0xff]
    %v121 = vld [vmem:[#allocation2 + $0x30] sm:$0xff]
    %v122 = vld [vmem:[#allocation2 + $0x38] sm:$0xff]
    %v123 = vld [vmem:[#allocation2 + $0x40] sm:$0xff]
    %v124 = vld [vmem:[#allocation2 + $0x48] sm:$0xff]
    %v125 = vld [vmem:[#allocation2 + $0x50] sm:$0xff]
    %v126 = vld [vmem:[#allocation2 + $0x58] sm:$0xff]
    %v127 = vld [vmem:[#allocation2 + $0x60] sm:$0xff]
    %v128 = vld [vmem:[#allocation2 + $0x68] sm:$0xff]
    %v129 = vld [vmem:[#allocation2 + $0x70] sm:$0xff]
    %v130 = vld [vmem:[#allocation2 + $0x78] sm:$0xff]
    %v131 = vld [vmem:[#allocation2 + $0x80] sm:$0xff]
    %v132 = vld [vmem:[#allocation2 + $0x88] sm:$0xff]
    %v133 = vld [vmem:[#allocation2 + $0x90] sm:$0xff]
    %v134 = vld [vmem:[#allocation2 + $0x98] sm:$0xff]
    %v135 = vld [vmem:[#allocation2 + $0xa0] sm:$0xff]
    %v136 = vld [vmem:[#allocation2 + $0xa8] sm:$0xff]
    %v137 = vld [vmem:[#allocation2 + $0xb0] sm:$0xff]
    %v138 = vld [vmem:[#allocation2 + $0xb8] sm:$0xff]
    %v139 = vpack.c.bf16 %v115, %v115
    %v140 = vpack.c.bf16 %v116, %v116
    %v141 = vpack.c.bf16 %v117, %v117
    %v142 = vpack.c.bf16 %v118, %v118
    %v143 = vpack.c.bf16 %v119, %v119
    %v144 = vpack.c.bf16 %v120, %v120
    %v145 = vpack.c.bf16 %v121, %v121
    %v146 = vpack.c.bf16 %v122, %v122
    %v147 = vpack.c.bf16 %v123, %v123
    %v148 = vpack.c.bf16 %v124, %v124
    %v149 = vpack.c.bf16 %v125, %v125
    %v150 = vpack.c.bf16 %v126, %v126
    %v151 = vpack.c.bf16 %v127, %v127
    %v152 = vpack.c.bf16 %v128, %v128
    %v153 = vpack.c.bf16 %v129, %v129
    %v154 = vpack.c.bf16 %v130, %v130
    %v155 = vpack.c.bf16 %v131, %v131
    %v156 = vpack.c.bf16 %v132, %v132
    %v157 = vpack.c.bf16 %v133, %v133
    %v158 = vpack.c.bf16 %v134, %v134
    %v159 = vpack.c.bf16 %v135, %v135
    %v160 = vpack.c.bf16 %v136, %v136
    %v161 = vpack.c.bf16 %v137, %v137
    %v162 = vpack.c.bf16 %v138, %v138
    %v163 = vld [vmem:[#allocation5] sm:$0xff]
    %v164 = vld [vmem:[#allocation5 + $0x8] sm:$0xff]
    %v165 = vld [vmem:[#allocation5 + $0x10] sm:$0xff]
    %v166 = vld [vmem:[#allocation5 + $0x18] sm:$0xff]
    %v167 = vld [vmem:[#allocation5 + $0x20] sm:$0xff]
    %v168 = vld [vmem:[#allocation5 + $0x28] sm:$0xff]
    %v169 = vld [vmem:[#allocation5 + $0x30] sm:$0xff]
    %v170 = vld [vmem:[#allocation5 + $0x38] sm:$0xff]
    %v171 = vld [vmem:[#allocation5 + $0x40] sm:$0xff]
    %v172 = vld [vmem:[#allocation5 + $0x48] sm:$0xff]
    %v173 = vld [vmem:[#allocation5 + $0x50] sm:$0xff]
    %v174 = vld [vmem:[#allocation5 + $0x58] sm:$0xff]
    %v175 = vld [vmem:[#allocation5 + $0x60] sm:$0xff]
    %v176 = vld [vmem:[#allocation5 + $0x68] sm:$0xff]
    %v177 = vld [vmem:[#allocation5 + $0x70] sm:$0xff]
    %v178 = vld [vmem:[#allocation5 + $0x78] sm:$0xff]
    %v179 = vld [vmem:[#allocation5 + $0x80] sm:$0xff]
    %v180 = vld [vmem:[#allocation5 + $0x88] sm:$0xff]
    %v181 = vld [vmem:[#allocation5 + $0x90] sm:$0xff]
    %v182 = vld [vmem:[#allocation5 + $0x98] sm:$0xff]
    %v183 = vld [vmem:[#allocation5 + $0xa0] sm:$0xff]
    %v184 = vld [vmem:[#allocation5 + $0xa8] sm:$0xff]
    %v185 = vld [vmem:[#allocation5 + $0xb0] sm:$0xff]
    %v186 = vld [vmem:[#allocation5 + $0xb8] sm:$0xff]
    %v187 = vld [vmem:[#allocation5 + $0xc0] sm:$0xff]
    %v188 = vld [vmem:[#allocation5 + $0xc8] sm:$0xff]
    %v189 = vld [vmem:[#allocation5 + $0xd0] sm:$0xff]
    %v190 = vld [vmem:[#allocation5 + $0xd8] sm:$0xff]
    %v191 = vld [vmem:[#allocation5 + $0xe0] sm:$0xff]
    %v192 = vld [vmem:[#allocation5 + $0xe8] sm:$0xff]
    %v193 = vld [vmem:[#allocation5 + $0xf0] sm:$0xff]
    %v194 = vld [vmem:[#allocation5 + $0xf8] sm:$0xff]
    %v195 = vld [vmem:[#allocation5 + $0x100] sm:$0xff]
    %v196 = vld [vmem:[#allocation5 + $0x108] sm:$0xff]
    %v197 = vld [vmem:[#allocation5 + $0x110] sm:$0xff]
    %v198 = vld [vmem:[#allocation5 + $0x118] sm:$0xff]
    %v199 = vld [vmem:[#allocation5 + $0x120] sm:$0xff]
    %v200 = vld [vmem:[#allocation5 + $0x128] sm:$0xff]
    %v201 = vld [vmem:[#allocation5 + $0x130] sm:$0xff]
    %v202 = vld [vmem:[#allocation5 + $0x138] sm:$0xff]
    %v203 = vld [vmem:[#allocation5 + $0x140] sm:$0xff]
    %v204 = vld [vmem:[#allocation5 + $0x148] sm:$0xff]
    %v205 = vld [vmem:[#allocation5 + $0x150] sm:$0xff]
    %v206 = vld [vmem:[#allocation5 + $0x158] sm:$0xff]
    %v207 = vld [vmem:[#allocation5 + $0x160] sm:$0xff]
    %v208 = vld [vmem:[#allocation5 + $0x168] sm:$0xff]
    %v209 = vld [vmem:[#allocation5 + $0x170] sm:$0xff]
    %v210 = vld [vmem:[#allocation5 + $0x178] sm:$0xff]
    %v211 = vld [vmem:[#allocation5 + $0x180] sm:$0xff]
    %v212 = vld [vmem:[#allocation5 + $0x188] sm:$0xff]
    %v213 = vld [vmem:[#allocation5 + $0x190] sm:$0xff]
    %v214 = vld [vmem:[#allocation5 + $0x198] sm:$0xff]
    %v215 = vld [vmem:[#allocation5 + $0x1a0] sm:$0xff]
    %v216 = vld [vmem:[#allocation5 + $0x1a8] sm:$0xff]
    %v217 = vld [vmem:[#allocation5 + $0x1b0] sm:$0xff]
    %v218 = vld [vmem:[#allocation5 + $0x1b8] sm:$0xff]
    %v219 = vld [vmem:[#allocation5 + $0x1c0] sm:$0xff]
    %v220 = vld [vmem:[#allocation5 + $0x1c8] sm:$0xff]
    %v221 = vld [vmem:[#allocation5 + $0x1d0] sm:$0xff]
    %v222 = vld [vmem:[#allocation5 + $0x1d8] sm:$0xff]
    %v223 = vld [vmem:[#allocation5 + $0x1e0] sm:$0xff]
    %v224 = vld [vmem:[#allocation5 + $0x1e8] sm:$0xff]
    %v225 = vld [vmem:[#allocation5 + $0x1f0] sm:$0xff]
    %v226 = vld [vmem:[#allocation5 + $0x1f8] sm:$0xff]
    %v227 = vld [vmem:[#allocation5 + $0x200] sm:$0xff]
    %v228 = vld [vmem:[#allocation5 + $0x208] sm:$0xff]
    %v229 = vld [vmem:[#allocation5 + $0x210] sm:$0xff]
    %v230 = vld [vmem:[#allocation5 + $0x218] sm:$0xff]
    %v231 = vld [vmem:[#allocation5 + $0x220] sm:$0xff]
    %v232 = vld [vmem:[#allocation5 + $0x228] sm:$0xff]
    %v233 = vld [vmem:[#allocation5 + $0x230] sm:$0xff]
    %v234 = vld [vmem:[#allocation5 + $0x238] sm:$0xff]
    %v235 = vld [vmem:[#allocation5 + $0x240] sm:$0xff]
    %v236 = vld [vmem:[#allocation5 + $0x248] sm:$0xff]
    %v237 = vld [vmem:[#allocation5 + $0x250] sm:$0xff]
    %v238 = vld [vmem:[#allocation5 + $0x258] sm:$0xff]
    %v239 = vld [vmem:[#allocation5 + $0x260] sm:$0xff]
    %v240 = vld [vmem:[#allocation5 + $0x268] sm:$0xff]
    %v241 = vld [vmem:[#allocation5 + $0x270] sm:$0xff]
    %v242 = vld [vmem:[#allocation5 + $0x278] sm:$0xff]
    %v243 = vld [vmem:[#allocation5 + $0x280] sm:$0xff]
    %v244 = vld [vmem:[#allocation5 + $0x288] sm:$0xff]
    %v245 = vld [vmem:[#allocation5 + $0x290] sm:$0xff]
    %v246 = vld [vmem:[#allocation5 + $0x298] sm:$0xff]
    %v247 = vld [vmem:[#allocation5 + $0x2a0] sm:$0xff]
    %v248 = vld [vmem:[#allocation5 + $0x2a8] sm:$0xff]
    %v249 = vld [vmem:[#allocation5 + $0x2b0] sm:$0xff]
    %v250 = vld [vmem:[#allocation5 + $0x2b8] sm:$0xff]
    %v251 = vld [vmem:[#allocation5 + $0x2c0] sm:$0xff]
    %v252 = vld [vmem:[#allocation5 + $0x2c8] sm:$0xff]
    %v253 = vld [vmem:[#allocation5 + $0x2d0] sm:$0xff]
    %v254 = vld [vmem:[#allocation5 + $0x2d8] sm:$0xff]
    %v255 = vld [vmem:[#allocation5 + $0x2e0] sm:$0xff]
    %v256 = vld [vmem:[#allocation5 + $0x2e8] sm:$0xff]
    %v257 = vld [vmem:[#allocation5 + $0x2f0] sm:$0xff]
    %v258 = vld [vmem:[#allocation5 + $0x2f8] sm:$0xff]
    %v259 = vld [vmem:[#allocation5 + $0x300] sm:$0xff]
    %v260 = vld [vmem:[#allocation5 + $0x308] sm:$0xff]
    %v261 = vld [vmem:[#allocation5 + $0x310] sm:$0xff]
    %v262 = vld [vmem:[#allocation5 + $0x318] sm:$0xff]
    %v263 = vld [vmem:[#allocation5 + $0x320] sm:$0xff]
    %v264 = vld [vmem:[#allocation5 + $0x328] sm:$0xff]
    %v265 = vld [vmem:[#allocation5 + $0x330] sm:$0xff]
    %v266 = vld [vmem:[#allocation5 + $0x338] sm:$0xff]
    %v267 = vld [vmem:[#allocation5 + $0x340] sm:$0xff]
    %v268 = vld [vmem:[#allocation5 + $0x348] sm:$0xff]
    %v269 = vld [vmem:[#allocation5 + $0x350] sm:$0xff]
    %v270 = vld [vmem:[#allocation5 + $0x358] sm:$0xff]
    %v271 = vld [vmem:[#allocation5 + $0x360] sm:$0xff]
    %v272 = vld [vmem:[#allocation5 + $0x368] sm:$0xff]
    %v273 = vld [vmem:[#allocation5 + $0x370] sm:$0xff]
    %v274 = vld [vmem:[#allocation5 + $0x378] sm:$0xff]
    %v275 = vld [vmem:[#allocation5 + $0x380] sm:$0xff]
    %v276 = vld [vmem:[#allocation5 + $0x388] sm:$0xff]
    %v277 = vld [vmem:[#allocation5 + $0x390] sm:$0xff]
    %v278 = vld [vmem:[#allocation5 + $0x398] sm:$0xff]
    %v279 = vld [vmem:[#allocation5 + $0x3a0] sm:$0xff]
    %v280 = vld [vmem:[#allocation5 + $0x3a8] sm:$0xff]
    %v281 = vld [vmem:[#allocation5 + $0x3b0] sm:$0xff]
    %v282 = vld [vmem:[#allocation5 + $0x3b8] sm:$0xff]
    %v283 = vld [vmem:[#allocation5 + $0x3c0] sm:$0xff]
    %v284 = vld [vmem:[#allocation5 + $0x3c8] sm:$0xff]
    %v285 = vld [vmem:[#allocation5 + $0x3d0] sm:$0xff]
    %v286 = vld [vmem:[#allocation5 + $0x3d8] sm:$0xff]
    %v287 = vld [vmem:[#allocation5 + $0x3e0] sm:$0xff]
    %v288 = vld [vmem:[#allocation5 + $0x3e8] sm:$0xff]
    %v289 = vld [vmem:[#allocation5 + $0x3f0] sm:$0xff]
    %v290 = vld [vmem:[#allocation5 + $0x3f8] sm:$0xff]
    %v291 = vld [vmem:[#allocation5 + $0x400] sm:$0xff]
    %v292 = vld [vmem:[#allocation5 + $0x408] sm:$0xff]
    %v293 = vld [vmem:[#allocation5 + $0x410] sm:$0xff]
    %v294 = vld [vmem:[#allocation5 + $0x418] sm:$0xff]
    %v295 = vld [vmem:[#allocation5 + $0x420] sm:$0xff]
    %v296 = vld [vmem:[#allocation5 + $0x428] sm:$0xff]
    %v297 = vld [vmem:[#allocation5 + $0x430] sm:$0xff]
    %v298 = vld [vmem:[#allocation5 + $0x438] sm:$0xff]
    %v299 = vld [vmem:[#allocation5 + $0x440] sm:$0xff]
    %v300 = vld [vmem:[#allocation5 + $0x448] sm:$0xff]
    %v301 = vld [vmem:[#allocation5 + $0x450] sm:$0xff]
    %v302 = vld [vmem:[#allocation5 + $0x458] sm:$0xff]
    %v303 = vld [vmem:[#allocation5 + $0x460] sm:$0xff]
    %v304 = vld [vmem:[#allocation5 + $0x468] sm:$0xff]
    %v305 = vld [vmem:[#allocation5 + $0x470] sm:$0xff]
    %v306 = vld [vmem:[#allocation5 + $0x478] sm:$0xff]
    %v307 = vld [vmem:[#allocation5 + $0x480] sm:$0xff]
    %v308 = vld [vmem:[#allocation5 + $0x488] sm:$0xff]
    %v309 = vld [vmem:[#allocation5 + $0x490] sm:$0xff]
    %v310 = vld [vmem:[#allocation5 + $0x498] sm:$0xff]
    %v311 = vld [vmem:[#allocation5 + $0x4a0] sm:$0xff]
    %v312 = vld [vmem:[#allocation5 + $0x4a8] sm:$0xff]
    %v313 = vld [vmem:[#allocation5 + $0x4b0] sm:$0xff]
    %v314 = vld [vmem:[#allocation5 + $0x4b8] sm:$0xff]
    %v315 = vld [vmem:[#allocation5 + $0x4c0] sm:$0xff]
    %v316 = vld [vmem:[#allocation5 + $0x4c8] sm:$0xff]
    %v317 = vld [vmem:[#allocation5 + $0x4d0] sm:$0xff]
    %v318 = vld [vmem:[#allocation5 + $0x4d8] sm:$0xff]
    %v319 = vld [vmem:[#allocation5 + $0x4e0] sm:$0xff]
    %v320 = vld [vmem:[#allocation5 + $0x4e8] sm:$0xff]
    %v321 = vld [vmem:[#allocation5 + $0x4f0] sm:$0xff]
    %v322 = vld [vmem:[#allocation5 + $0x4f8] sm:$0xff]
    %v323 = vld [vmem:[#allocation5 + $0x500] sm:$0xff]
    %v324 = vld [vmem:[#allocation5 + $0x508] sm:$0xff]
    %v325 = vld [vmem:[#allocation5 + $0x510] sm:$0xff]
    %v326 = vld [vmem:[#allocation5 + $0x518] sm:$0xff]
    %v327 = vld [vmem:[#allocation5 + $0x520] sm:$0xff]
    %v328 = vld [vmem:[#allocation5 + $0x528] sm:$0xff]
    %v329 = vld [vmem:[#allocation5 + $0x530] sm:$0xff]
    %v330 = vld [vmem:[#allocation5 + $0x538] sm:$0xff]
    %v331 = vld [vmem:[#allocation5 + $0x540] sm:$0xff]
    %v332 = vld [vmem:[#allocation5 + $0x548] sm:$0xff]
    %v333 = vld [vmem:[#allocation5 + $0x550] sm:$0xff]
    %v334 = vld [vmem:[#allocation5 + $0x558] sm:$0xff]
    %v335 = vld [vmem:[#allocation5 + $0x560] sm:$0xff]
    %v336 = vld [vmem:[#allocation5 + $0x568] sm:$0xff]
    %v337 = vld [vmem:[#allocation5 + $0x570] sm:$0xff]
    %v338 = vld [vmem:[#allocation5 + $0x578] sm:$0xff]
    %v339 = vld [vmem:[#allocation5 + $0x580] sm:$0xff]
    %v340 = vld [vmem:[#allocation5 + $0x588] sm:$0xff]
    %v341 = vld [vmem:[#allocation5 + $0x590] sm:$0xff]
    %v342 = vld [vmem:[#allocation5 + $0x598] sm:$0xff]
    %v343 = vld [vmem:[#allocation5 + $0x5a0] sm:$0xff]
    %v344 = vld [vmem:[#allocation5 + $0x5a8] sm:$0xff]
    %v345 = vld [vmem:[#allocation5 + $0x5b0] sm:$0xff]
    %v346 = vld [vmem:[#allocation5 + $0x5b8] sm:$0xff]
    %v347 = vld [vmem:[#allocation5 + $0x5c0] sm:$0xff]
    %v348 = vld [vmem:[#allocation5 + $0x5c8] sm:$0xff]
    %v349 = vld [vmem:[#allocation5 + $0x5d0] sm:$0xff]
    %v350 = vld [vmem:[#allocation5 + $0x5d8] sm:$0xff]
    %v351 = vld [vmem:[#allocation5 + $0x5e0] sm:$0xff]
    %v352 = vld [vmem:[#allocation5 + $0x5e8] sm:$0xff]
    %v353 = vld [vmem:[#allocation5 + $0x5f0] sm:$0xff]
    %v354 = vld [vmem:[#allocation5 + $0x5f8] sm:$0xff]
    %v355 = vld [vmem:[#allocation5 + $0x600] sm:$0xff]
    %v356 = vld [vmem:[#allocation5 + $0x608] sm:$0xff]
    %v357 = vld [vmem:[#allocation5 + $0x610] sm:$0xff]
    %v358 = vld [vmem:[#allocation5 + $0x618] sm:$0xff]
    %v359 = vld [vmem:[#allocation5 + $0x620] sm:$0xff]
    %v360 = vld [vmem:[#allocation5 + $0x628] sm:$0xff]
    %v361 = vld [vmem:[#allocation5 + $0x630] sm:$0xff]
    %v362 = vld [vmem:[#allocation5 + $0x638] sm:$0xff]
    %v363 = vld [vmem:[#allocation5 + $0x640] sm:$0xff]
    %v364 = vld [vmem:[#allocation5 + $0x648] sm:$0xff]
    %v365 = vld [vmem:[#allocation5 + $0x650] sm:$0xff]
    %v366 = vld [vmem:[#allocation5 + $0x658] sm:$0xff]
    %v367 = vld [vmem:[#allocation5 + $0x660] sm:$0xff]
    %v368 = vld [vmem:[#allocation5 + $0x668] sm:$0xff]
    %v369 = vld [vmem:[#allocation5 + $0x670] sm:$0xff]
    %v370 = vld [vmem:[#allocation5 + $0x678] sm:$0xff]
    %v371 = vld [vmem:[#allocation5 + $0x680] sm:$0xff]
    %v372 = vld [vmem:[#allocation5 + $0x688] sm:$0xff]
    %v373 = vld [vmem:[#allocation5 + $0x690] sm:$0xff]
    %v374 = vld [vmem:[#allocation5 + $0x698] sm:$0xff]
    %v375 = vld [vmem:[#allocation5 + $0x6a0] sm:$0xff]
    %v376 = vld [vmem:[#allocation5 + $0x6a8] sm:$0xff]
    %v377 = vld [vmem:[#allocation5 + $0x6b0] sm:$0xff]
    %v378 = vld [vmem:[#allocation5 + $0x6b8] sm:$0xff]
    %v379 = vld [vmem:[#allocation5 + $0x6c0] sm:$0xff]
    %v380 = vld [vmem:[#allocation5 + $0x6c8] sm:$0xff]
    %v381 = vld [vmem:[#allocation5 + $0x6d0] sm:$0xff]
    %v382 = vld [vmem:[#allocation5 + $0x6d8] sm:$0xff]
    %v383 = vld [vmem:[#allocation5 + $0x6e0] sm:$0xff]
    %v384 = vld [vmem:[#allocation5 + $0x6e8] sm:$0xff]
    %v385 = vld [vmem:[#allocation5 + $0x6f0] sm:$0xff]
    %v386 = vld [vmem:[#allocation5 + $0x6f8] sm:$0xff]
    %v387 = vld [vmem:[#allocation5 + $0x700] sm:$0xff]
    %v388 = vld [vmem:[#allocation5 + $0x708] sm:$0xff]
    %v389 = vld [vmem:[#allocation5 + $0x710] sm:$0xff]
    %v390 = vld [vmem:[#allocation5 + $0x718] sm:$0xff]
    %v391 = vld [vmem:[#allocation5 + $0x720] sm:$0xff]
    %v392 = vld [vmem:[#allocation5 + $0x728] sm:$0xff]
    %v393 = vld [vmem:[#allocation5 + $0x730] sm:$0xff]
    %v394 = vld [vmem:[#allocation5 + $0x738] sm:$0xff]
    %v395 = vld [vmem:[#allocation5 + $0x740] sm:$0xff]
    %v396 = vld [vmem:[#allocation5 + $0x748] sm:$0xff]
    %v397 = vld [vmem:[#allocation5 + $0x750] sm:$0xff]
    %v398 = vld [vmem:[#allocation5 + $0x758] sm:$0xff]
    %v399 = vld [vmem:[#allocation5 + $0x760] sm:$0xff]
    %v400 = vld [vmem:[#allocation5 + $0x768] sm:$0xff]
    %v401 = vld [vmem:[#allocation5 + $0x770] sm:$0xff]
    %v402 = vld [vmem:[#allocation5 + $0x778] sm:$0xff]
    %v403 = vld [vmem:[#allocation5 + $0x780] sm:$0xff]
    %v404 = vld [vmem:[#allocation5 + $0x788] sm:$0xff]
    %v405 = vld [vmem:[#allocation5 + $0x790] sm:$0xff]
    %v406 = vld [vmem:[#allocation5 + $0x798] sm:$0xff]
    %v407 = vld [vmem:[#allocation5 + $0x7a0] sm:$0xff]
    %v408 = vld [vmem:[#allocation5 + $0x7a8] sm:$0xff]
    %v409 = vld [vmem:[#allocation5 + $0x7b0] sm:$0xff]
    %v410 = vld [vmem:[#allocation5 + $0x7b8] sm:$0xff]
    %v411 = vld [vmem:[#allocation5 + $0x7c0] sm:$0xff]
    %v412 = vld [vmem:[#allocation5 + $0x7c8] sm:$0xff]
    %v413 = vld [vmem:[#allocation5 + $0x7d0] sm:$0xff]
    %v414 = vld [vmem:[#allocation5 + $0x7d8] sm:$0xff]
    %v415 = vld [vmem:[#allocation5 + $0x7e0] sm:$0xff]
    %v416 = vld [vmem:[#allocation5 + $0x7e8] sm:$0xff]
    %v417 = vld [vmem:[#allocation5 + $0x7f0] sm:$0xff]
    %v418 = vld [vmem:[#allocation5 + $0x7f8] sm:$0xff]
    %v419 = vld [vmem:[#allocation5 + $0x800] sm:$0xff]
    %v420 = vld [vmem:[#allocation5 + $0x808] sm:$0xff]
    %v421 = vld [vmem:[#allocation5 + $0x810] sm:$0xff]
    %v422 = vld [vmem:[#allocation5 + $0x818] sm:$0xff]
    %v423 = vld [vmem:[#allocation5 + $0x820] sm:$0xff]
    %v424 = vld [vmem:[#allocation5 + $0x828] sm:$0xff]
    %v425 = vld [vmem:[#allocation5 + $0x830] sm:$0xff]
    %v426 = vld [vmem:[#allocation5 + $0x838] sm:$0xff]
    %v427 = vld [vmem:[#allocation5 + $0x840] sm:$0xff]
    %v428 = vld [vmem:[#allocation5 + $0x848] sm:$0xff]
    %v429 = vld [vmem:[#allocation5 + $0x850] sm:$0xff]
    %v430 = vld [vmem:[#allocation5 + $0x858] sm:$0xff]
    %v431 = vld [vmem:[#allocation5 + $0x860] sm:$0xff]
    %v432 = vld [vmem:[#allocation5 + $0x868] sm:$0xff]
    %v433 = vld [vmem:[#allocation5 + $0x870] sm:$0xff]
    %v434 = vld [vmem:[#allocation5 + $0x878] sm:$0xff]
    %v435 = vld [vmem:[#allocation5 + $0x880] sm:$0xff]
    %v436 = vld [vmem:[#allocation5 + $0x888] sm:$0xff]
    %v437 = vld [vmem:[#allocation5 + $0x890] sm:$0xff]
    %v438 = vld [vmem:[#allocation5 + $0x898] sm:$0xff]
    %v439 = vld [vmem:[#allocation5 + $0x8a0] sm:$0xff]
    %v440 = vld [vmem:[#allocation5 + $0x8a8] sm:$0xff]
    %v441 = vld [vmem:[#allocation5 + $0x8b0] sm:$0xff]
    %v442 = vld [vmem:[#allocation5 + $0x8b8] sm:$0xff]
    %v443 = vld [vmem:[#allocation5 + $0x8c0] sm:$0xff]
    %v444 = vld [vmem:[#allocation5 + $0x8c8] sm:$0xff]
    %v445 = vld [vmem:[#allocation5 + $0x8d0] sm:$0xff]
    %v446 = vld [vmem:[#allocation5 + $0x8d8] sm:$0xff]
    %v447 = vld [vmem:[#allocation5 + $0x8e0] sm:$0xff]
    %v448 = vld [vmem:[#allocation5 + $0x8e8] sm:$0xff]
    %v449 = vld [vmem:[#allocation5 + $0x8f0] sm:$0xff]
    %v450 = vld [vmem:[#allocation5 + $0x8f8] sm:$0xff]
    %v451 = vld [vmem:[#allocation5 + $0x900] sm:$0xff]
    %v452 = vld [vmem:[#allocation5 + $0x908] sm:$0xff]
    %v453 = vld [vmem:[#allocation5 + $0x910] sm:$0xff]
    %v454 = vld [vmem:[#allocation5 + $0x918] sm:$0xff]
    %v455 = vld [vmem:[#allocation5 + $0x920] sm:$0xff]
    %v456 = vld [vmem:[#allocation5 + $0x928] sm:$0xff]
    %v457 = vld [vmem:[#allocation5 + $0x930] sm:$0xff]
    %v458 = vld [vmem:[#allocation5 + $0x938] sm:$0xff]
    %v459 = vld [vmem:[#allocation5 + $0x940] sm:$0xff]
    %v460 = vld [vmem:[#allocation5 + $0x948] sm:$0xff]
    %v461 = vld [vmem:[#allocation5 + $0x950] sm:$0xff]
    %v462 = vld [vmem:[#allocation5 + $0x958] sm:$0xff]
    %v463 = vld [vmem:[#allocation5 + $0x960] sm:$0xff]
    %v464 = vld [vmem:[#allocation5 + $0x968] sm:$0xff]
    %v465 = vld [vmem:[#allocation5 + $0x970] sm:$0xff]
    %v466 = vld [vmem:[#allocation5 + $0x978] sm:$0xff]
    %v467 = vld [vmem:[#allocation5 + $0x980] sm:$0xff]
    %v468 = vld [vmem:[#allocation5 + $0x988] sm:$0xff]
    %v469 = vld [vmem:[#allocation5 + $0x990] sm:$0xff]
    %v470 = vld [vmem:[#allocation5 + $0x998] sm:$0xff]
    %v471 = vld [vmem:[#allocation5 + $0x9a0] sm:$0xff]
    %v472 = vld [vmem:[#allocation5 + $0x9a8] sm:$0xff]
    %v473 = vld [vmem:[#allocation5 + $0x9b0] sm:$0xff]
    %v474 = vld [vmem:[#allocation5 + $0x9b8] sm:$0xff]
    %v475 = vld [vmem:[#allocation5 + $0x9c0] sm:$0xff]
    %v476 = vld [vmem:[#allocation5 + $0x9c8] sm:$0xff]
    %v477 = vld [vmem:[#allocation5 + $0x9d0] sm:$0xff]
    %v478 = vld [vmem:[#allocation5 + $0x9d8] sm:$0xff]
    %v479 = vld [vmem:[#allocation5 + $0x9e0] sm:$0xff]
    %v480 = vld [vmem:[#allocation5 + $0x9e8] sm:$0xff]
    %v481 = vld [vmem:[#allocation5 + $0x9f0] sm:$0xff]
    %v482 = vld [vmem:[#allocation5 + $0x9f8] sm:$0xff]
    %v483 = vld [vmem:[#allocation5 + $0xa00] sm:$0xff]
    %v484 = vld [vmem:[#allocation5 + $0xa08] sm:$0xff]
    %v485 = vld [vmem:[#allocation5 + $0xa10] sm:$0xff]
    %v486 = vld [vmem:[#allocation5 + $0xa18] sm:$0xff]
    %v487 = vld [vmem:[#allocation5 + $0xa20] sm:$0xff]
    %v488 = vld [vmem:[#allocation5 + $0xa28] sm:$0xff]
    %v489 = vld [vmem:[#allocation5 + $0xa30] sm:$0xff]
    %v490 = vld [vmem:[#allocation5 + $0xa38] sm:$0xff]
    %v491 = vld [vmem:[#allocation5 + $0xa40] sm:$0xff]
    %v492 = vld [vmem:[#allocation5 + $0xa48] sm:$0xff]
    %v493 = vld [vmem:[#allocation5 + $0xa50] sm:$0xff]
    %v494 = vld [vmem:[#allocation5 + $0xa58] sm:$0xff]
    %v495 = vld [vmem:[#allocation5 + $0xa60] sm:$0xff]
    %v496 = vld [vmem:[#allocation5 + $0xa68] sm:$0xff]
    %v497 = vld [vmem:[#allocation5 + $0xa70] sm:$0xff]
    %v498 = vld [vmem:[#allocation5 + $0xa78] sm:$0xff]
    %v499 = vld [vmem:[#allocation5 + $0xa80] sm:$0xff]
    %v500 = vld [vmem:[#allocation5 + $0xa88] sm:$0xff]
    %v501 = vld [vmem:[#allocation5 + $0xa90] sm:$0xff]
    %v502 = vld [vmem:[#allocation5 + $0xa98] sm:$0xff]
    %v503 = vld [vmem:[#allocation5 + $0xaa0] sm:$0xff]
    %v504 = vld [vmem:[#allocation5 + $0xaa8] sm:$0xff]
    %v505 = vld [vmem:[#allocation5 + $0xab0] sm:$0xff]
    %v506 = vld [vmem:[#allocation5 + $0xab8] sm:$0xff]
    %v507 = vld [vmem:[#allocation5 + $0xac0] sm:$0xff]
    %v508 = vld [vmem:[#allocation5 + $0xac8] sm:$0xff]
    %v509 = vld [vmem:[#allocation5 + $0xad0] sm:$0xff]
    %v510 = vld [vmem:[#allocation5 + $0xad8] sm:$0xff]
    %v511 = vld [vmem:[#allocation5 + $0xae0] sm:$0xff]
    %v512 = vld [vmem:[#allocation5 + $0xae8] sm:$0xff]
    %v513 = vld [vmem:[#allocation5 + $0xaf0] sm:$0xff]
    %v514 = vld [vmem:[#allocation5 + $0xaf8] sm:$0xff]
    %v515 = vld [vmem:[#allocation5 + $0xb00] sm:$0xff]
    %v516 = vld [vmem:[#allocation5 + $0xb08] sm:$0xff]
    %v517 = vld [vmem:[#allocation5 + $0xb10] sm:$0xff]
    %v518 = vld [vmem:[#allocation5 + $0xb18] sm:$0xff]
    %v519 = vld [vmem:[#allocation5 + $0xb20] sm:$0xff]
    %v520 = vld [vmem:[#allocation5 + $0xb28] sm:$0xff]
    %v521 = vld [vmem:[#allocation5 + $0xb30] sm:$0xff]
    %v522 = vld [vmem:[#allocation5 + $0xb38] sm:$0xff]
    %v523 = vld [vmem:[#allocation5 + $0xb40] sm:$0xff]
    %v524 = vld [vmem:[#allocation5 + $0xb48] sm:$0xff]
    %v525 = vld [vmem:[#allocation5 + $0xb50] sm:$0xff]
    %v526 = vld [vmem:[#allocation5 + $0xb58] sm:$0xff]
    %v527 = vld [vmem:[#allocation5 + $0xb60] sm:$0xff]
    %v528 = vld [vmem:[#allocation5 + $0xb68] sm:$0xff]
    %v529 = vld [vmem:[#allocation5 + $0xb70] sm:$0xff]
    %v530 = vld [vmem:[#allocation5 + $0xb78] sm:$0xff]
    %v531 = vld [vmem:[#allocation5 + $0xb80] sm:$0xff]
    %v532 = vld [vmem:[#allocation5 + $0xb88] sm:$0xff]
    %v533 = vld [vmem:[#allocation5 + $0xb90] sm:$0xff]
    %v534 = vld [vmem:[#allocation5 + $0xb98] sm:$0xff]
    %v535 = vld [vmem:[#allocation5 + $0xba0] sm:$0xff]
    %v536 = vld [vmem:[#allocation5 + $0xba8] sm:$0xff]
    %v537 = vld [vmem:[#allocation5 + $0xbb0] sm:$0xff]
    %v538 = vld [vmem:[#allocation5 + $0xbb8] sm:$0xff]
    %v539 = vld [vmem:[#allocation5 + $0xbc0] sm:$0xff]
    %v540 = vld [vmem:[#allocation5 + $0xbc8] sm:$0xff]
    %v541 = vld [vmem:[#allocation5 + $0xbd0] sm:$0xff]
    %v542 = vld [vmem:[#allocation5 + $0xbd8] sm:$0xff]
    %v543 = vld [vmem:[#allocation5 + $0xbe0] sm:$0xff]
    %v544 = vld [vmem:[#allocation5 + $0xbe8] sm:$0xff]
    %v545 = vld [vmem:[#allocation5 + $0xbf0] sm:$0xff]
    %v546 = vld [vmem:[#allocation5 + $0xbf8] sm:$0xff]
    %v547 = vld [vmem:[#allocation7] sm:$0x3]
    %v549 = vlaneseq
    %v550 = vshrl.u32 %v549, 7
    %v551 = vsub.s32 0, %v550
    %v552 = vrot.slane %v547, %v551
    %v553 = vlaneseq
    %v554 = vshrl.u32 %v553, 7
    %v555 = vsub.s32 1, %v554
    %v556 = vrot.slane %v547, %v555
    %v943 = vunpack.c.l.b16 %v163
    %v944 = vunpack.c.h.b16 %v163
    %v945 = vunpack.c.l.b16 %v164
    %v946 = vunpack.c.h.b16 %v164
    %v947 = vunpack.c.l.b16 %v165
    %v948 = vunpack.c.h.b16 %v165
    %v949 = vunpack.c.l.b16 %v166
    %v950 = vunpack.c.h.b16 %v166
    %v951 = vunpack.c.l.b16 %v167
    %v952 = vunpack.c.h.b16 %v167
    %v953 = vunpack.c.l.b16 %v168
    %v954 = vunpack.c.h.b16 %v168
    %v955 = vunpack.c.l.b16 %v169
    %v956 = vunpack.c.h.b16 %v169
    %v957 = vunpack.c.l.b16 %v170
    %v958 = vunpack.c.h.b16 %v170
    %v959 = vunpack.c.l.b16 %v171
    %v960 = vunpack.c.h.b16 %v171
    %v961 = vunpack.c.l.b16 %v172
    %v962 = vunpack.c.h.b16 %v172
    %v963 = vunpack.c.l.b16 %v173
    %v964 = vunpack.c.h.b16 %v173
    %v965 = vunpack.c.l.b16 %v174
    %v966 = vunpack.c.h.b16 %v174
    %v967 = vunpack.c.l.b16 %v175
    %v968 = vunpack.c.h.b16 %v175
    %v969 = vunpack.c.l.b16 %v176
    %v970 = vunpack.c.h.b16 %v176
    %v971 = vunpack.c.l.b16 %v177
    %v972 = vunpack.c.h.b16 %v177
    %v973 = vunpack.c.l.b16 %v178
    %v974 = vunpack.c.h.b16 %v178
    %v975 = vunpack.c.l.b16 %v179
    %v976 = vunpack.c.h.b16 %v179
    %v977 = vunpack.c.l.b16 %v180
    %v978 = vunpack.c.h.b16 %v180
    %v979 = vunpack.c.l.b16 %v181
    %v980 = vunpack.c.h.b16 %v181
    %v981 = vunpack.c.l.b16 %v182
    %v982 = vunpack.c.h.b16 %v182
    %v983 = vunpack.c.l.b16 %v183
    %v984 = vunpack.c.h.b16 %v183
    %v985 = vunpack.c.l.b16 %v184
    %v986 = vunpack.c.h.b16 %v184
    %v987 = vunpack.c.l.b16 %v185
    %v988 = vunpack.c.h.b16 %v185
    %v989 = vunpack.c.l.b16 %v186
    %v990 = vunpack.c.h.b16 %v186
    %v991 = vunpack.c.l.b16 %v187
    %v992 = vunpack.c.h.b16 %v187
    %v993 = vunpack.c.l.b16 %v188
    %v994 = vunpack.c.h.b16 %v188
    %v995 = vunpack.c.l.b16 %v189
    %v996 = vunpack.c.h.b16 %v189
    %v997 = vunpack.c.l.b16 %v190
    %v998 = vunpack.c.h.b16 %v190
    %v999 = vunpack.c.l.b16 %v191
    %v1000 = vunpack.c.h.b16 %v191
    %v1001 = vunpack.c.l.b16 %v192
    %v1002 = vunpack.c.h.b16 %v192
    %v1003 = vunpack.c.l.b16 %v193
    %v1004 = vunpack.c.h.b16 %v193
    %v1005 = vunpack.c.l.b16 %v194
    %v1006 = vunpack.c.h.b16 %v194
    %v1007 = vunpack.c.l.b16 %v195
    %v1008 = vunpack.c.h.b16 %v195
    %v1009 = vunpack.c.l.b16 %v196
    %v1010 = vunpack.c.h.b16 %v196
    %v1011 = vunpack.c.l.b16 %v197
    %v1012 = vunpack.c.h.b16 %v197
    %v1013 = vunpack.c.l.b16 %v198
    %v1014 = vunpack.c.h.b16 %v198
    %v1015 = vunpack.c.l.b16 %v199
    %v1016 = vunpack.c.h.b16 %v199
    %v1017 = vunpack.c.l.b16 %v200
    %v1018 = vunpack.c.h.b16 %v200
    %v1019 = vunpack.c.l.b16 %v201
    %v1020 = vunpack.c.h.b16 %v201
    %v1021 = vunpack.c.l.b16 %v202
    %v1022 = vunpack.c.h.b16 %v202
    %v1023 = vunpack.c.l.b16 %v203
    %v1024 = vunpack.c.h.b16 %v203
    %v1025 = vunpack.c.l.b16 %v204
    %v1026 = vunpack.c.h.b16 %v204
    %v1027 = vunpack.c.l.b16 %v205
    %v1028 = vunpack.c.h.b16 %v205
    %v1029 = vunpack.c.l.b16 %v206
    %v1030 = vunpack.c.h.b16 %v206
    %v1031 = vunpack.c.l.b16 %v207
    %v1032 = vunpack.c.h.b16 %v207
    %v1033 = vunpack.c.l.b16 %v208
    %v1034 = vunpack.c.h.b16 %v208
    %v1035 = vunpack.c.l.b16 %v209
    %v1036 = vunpack.c.h.b16 %v209
    %v1037 = vunpack.c.l.b16 %v210
    %v1038 = vunpack.c.h.b16 %v210
    %v1039 = vunpack.c.l.b16 %v211
    %v1040 = vunpack.c.h.b16 %v211
    %v1041 = vunpack.c.l.b16 %v212
    %v1042 = vunpack.c.h.b16 %v212
    %v1043 = vunpack.c.l.b16 %v213
    %v1044 = vunpack.c.h.b16 %v213
    %v1045 = vunpack.c.l.b16 %v214
    %v1046 = vunpack.c.h.b16 %v214
    %v1047 = vunpack.c.l.b16 %v215
    %v1048 = vunpack.c.h.b16 %v215
    %v1049 = vunpack.c.l.b16 %v216
    %v1050 = vunpack.c.h.b16 %v216
    %v1051 = vunpack.c.l.b16 %v217
    %v1052 = vunpack.c.h.b16 %v217
    %v1053 = vunpack.c.l.b16 %v218
    %v1054 = vunpack.c.h.b16 %v218
    %v1055 = vunpack.c.l.b16 %v219
    %v1056 = vunpack.c.h.b16 %v219
    %v1057 = vunpack.c.l.b16 %v220
    %v1058 = vunpack.c.h.b16 %v220
    %v1059 = vunpack.c.l.b16 %v221
    %v1060 = vunpack.c.h.b16 %v221
    %v1061 = vunpack.c.l.b16 %v222
    %v1062 = vunpack.c.h.b16 %v222
    %v1063 = vunpack.c.l.b16 %v223
    %v1064 = vunpack.c.h.b16 %v223
    %v1065 = vunpack.c.l.b16 %v224
    %v1066 = vunpack.c.h.b16 %v224
    %v1067 = vunpack.c.l.b16 %v225
    %v1068 = vunpack.c.h.b16 %v225
    %v1069 = vunpack.c.l.b16 %v226
    %v1070 = vunpack.c.h.b16 %v226
    %v1071 = vunpack.c.l.b16 %v227
    %v1072 = vunpack.c.h.b16 %v227
    %v1073 = vunpack.c.l.b16 %v228
    %v1074 = vunpack.c.h.b16 %v228
    %v1075 = vunpack.c.l.b16 %v229
    %v1076 = vunpack.c.h.b16 %v229
    %v1077 = vunpack.c.l.b16 %v230
    %v1078 = vunpack.c.h.b16 %v230
    %v1079 = vunpack.c.l.b16 %v231
    %v1080 = vunpack.c.h.b16 %v231
    %v1081 = vunpack.c.l.b16 %v232
    %v1082 = vunpack.c.h.b16 %v232
    %v1083 = vunpack.c.l.b16 %v233
    %v1084 = vunpack.c.h.b16 %v233
    %v1085 = vunpack.c.l.b16 %v234
    %v1086 = vunpack.c.h.b16 %v234
    %v1087 = vunpack.c.l.b16 %v235
    %v1088 = vunpack.c.h.b16 %v235
    %v1089 = vunpack.c.l.b16 %v236
    %v1090 = vunpack.c.h.b16 %v236
    %v1091 = vunpack.c.l.b16 %v237
    %v1092 = vunpack.c.h.b16 %v237
    %v1093 = vunpack.c.l.b16 %v238
    %v1094 = vunpack.c.h.b16 %v238
    %v1095 = vunpack.c.l.b16 %v239
    %v1096 = vunpack.c.h.b16 %v239
    %v1097 = vunpack.c.l.b16 %v240
    %v1098 = vunpack.c.h.b16 %v240
    %v1099 = vunpack.c.l.b16 %v241
    %v1100 = vunpack.c.h.b16 %v241
    %v1101 = vunpack.c.l.b16 %v242
    %v1102 = vunpack.c.h.b16 %v242
    %v1103 = vunpack.c.l.b16 %v243
    %v1104 = vunpack.c.h.b16 %v243
    %v1105 = vunpack.c.l.b16 %v244
    %v1106 = vunpack.c.h.b16 %v244
    %v1107 = vunpack.c.l.b16 %v245
    %v1108 = vunpack.c.h.b16 %v245
    %v1109 = vunpack.c.l.b16 %v246
    %v1110 = vunpack.c.h.b16 %v246
    %v1111 = vunpack.c.l.b16 %v247
    %v1112 = vunpack.c.h.b16 %v247
    %v1113 = vunpack.c.l.b16 %v248
    %v1114 = vunpack.c.h.b16 %v248
    %v1115 = vunpack.c.l.b16 %v249
    %v1116 = vunpack.c.h.b16 %v249
    %v1117 = vunpack.c.l.b16 %v250
    %v1118 = vunpack.c.h.b16 %v250
    %v1119 = vunpack.c.l.b16 %v251
    %v1120 = vunpack.c.h.b16 %v251
    %v1121 = vunpack.c.l.b16 %v252
    %v1122 = vunpack.c.h.b16 %v252
    %v1123 = vunpack.c.l.b16 %v253
    %v1124 = vunpack.c.h.b16 %v253
    %v1125 = vunpack.c.l.b16 %v254
    %v1126 = vunpack.c.h.b16 %v254
    %v1127 = vunpack.c.l.b16 %v255
    %v1128 = vunpack.c.h.b16 %v255
    %v1129 = vunpack.c.l.b16 %v256
    %v1130 = vunpack.c.h.b16 %v256
    %v1131 = vunpack.c.l.b16 %v257
    %v1132 = vunpack.c.h.b16 %v257
    %v1133 = vunpack.c.l.b16 %v258
    %v1134 = vunpack.c.h.b16 %v258
    %v1135 = vunpack.c.l.b16 %v259
    %v1136 = vunpack.c.h.b16 %v259
    %v1137 = vunpack.c.l.b16 %v260
    %v1138 = vunpack.c.h.b16 %v260
    %v1139 = vunpack.c.l.b16 %v261
    %v1140 = vunpack.c.h.b16 %v261
    %v1141 = vunpack.c.l.b16 %v262
    %v1142 = vunpack.c.h.b16 %v262
    %v1143 = vunpack.c.l.b16 %v263
    %v1144 = vunpack.c.h.b16 %v263
    %v1145 = vunpack.c.l.b16 %v264
    %v1146 = vunpack.c.h.b16 %v264
    %v1147 = vunpack.c.l.b16 %v265
    %v1148 = vunpack.c.h.b16 %v265
    %v1149 = vunpack.c.l.b16 %v266
    %v1150 = vunpack.c.h.b16 %v266
    %v1151 = vunpack.c.l.b16 %v267
    %v1152 = vunpack.c.h.b16 %v267
    %v1153 = vunpack.c.l.b16 %v268
    %v1154 = vunpack.c.h.b16 %v268
    %v1155 = vunpack.c.l.b16 %v269
    %v1156 = vunpack.c.h.b16 %v269
    %v1157 = vunpack.c.l.b16 %v270
    %v1158 = vunpack.c.h.b16 %v270
    %v1159 = vunpack.c.l.b16 %v271
    %v1160 = vunpack.c.h.b16 %v271
    %v1161 = vunpack.c.l.b16 %v272
    %v1162 = vunpack.c.h.b16 %v272
    %v1163 = vunpack.c.l.b16 %v273
    %v1164 = vunpack.c.h.b16 %v273
    %v1165 = vunpack.c.l.b16 %v274
    %v1166 = vunpack.c.h.b16 %v274
    %v1167 = vunpack.c.l.b16 %v275
    %v1168 = vunpack.c.h.b16 %v275
    %v1169 = vunpack.c.l.b16 %v276
    %v1170 = vunpack.c.h.b16 %v276
    %v1171 = vunpack.c.l.b16 %v277
    %v1172 = vunpack.c.h.b16 %v277
    %v1173 = vunpack.c.l.b16 %v278
    %v1174 = vunpack.c.h.b16 %v278
    %v1175 = vunpack.c.l.b16 %v279
    %v1176 = vunpack.c.h.b16 %v279
    %v1177 = vunpack.c.l.b16 %v280
    %v1178 = vunpack.c.h.b16 %v280
    %v1179 = vunpack.c.l.b16 %v281
    %v1180 = vunpack.c.h.b16 %v281
    %v1181 = vunpack.c.l.b16 %v282
    %v1182 = vunpack.c.h.b16 %v282
    %v1183 = vunpack.c.l.b16 %v283
    %v1184 = vunpack.c.h.b16 %v283
    %v1185 = vunpack.c.l.b16 %v284
    %v1186 = vunpack.c.h.b16 %v284
    %v1187 = vunpack.c.l.b16 %v285
    %v1188 = vunpack.c.h.b16 %v285
    %v1189 = vunpack.c.l.b16 %v286
    %v1190 = vunpack.c.h.b16 %v286
    %v1191 = vunpack.c.l.b16 %v287
    %v1192 = vunpack.c.h.b16 %v287
    %v1193 = vunpack.c.l.b16 %v288
    %v1194 = vunpack.c.h.b16 %v288
    %v1195 = vunpack.c.l.b16 %v289
    %v1196 = vunpack.c.h.b16 %v289
    %v1197 = vunpack.c.l.b16 %v290
    %v1198 = vunpack.c.h.b16 %v290
    %v1199 = vunpack.c.l.b16 %v291
    %v1200 = vunpack.c.h.b16 %v291
    %v1201 = vunpack.c.l.b16 %v292
    %v1202 = vunpack.c.h.b16 %v292
    %v1203 = vunpack.c.l.b16 %v293
    %v1204 = vunpack.c.h.b16 %v293
    %v1205 = vunpack.c.l.b16 %v294
    %v1206 = vunpack.c.h.b16 %v294
    %v1207 = vunpack.c.l.b16 %v295
    %v1208 = vunpack.c.h.b16 %v295
    %v1209 = vunpack.c.l.b16 %v296
    %v1210 = vunpack.c.h.b16 %v296
    %v1211 = vunpack.c.l.b16 %v297
    %v1212 = vunpack.c.h.b16 %v297
    %v1213 = vunpack.c.l.b16 %v298
    %v1214 = vunpack.c.h.b16 %v298
    %v1215 = vunpack.c.l.b16 %v299
    %v1216 = vunpack.c.h.b16 %v299
    %v1217 = vunpack.c.l.b16 %v300
    %v1218 = vunpack.c.h.b16 %v300
    %v1219 = vunpack.c.l.b16 %v301
    %v1220 = vunpack.c.h.b16 %v301
    %v1221 = vunpack.c.l.b16 %v302
    %v1222 = vunpack.c.h.b16 %v302
    %v1223 = vunpack.c.l.b16 %v303
    %v1224 = vunpack.c.h.b16 %v303
    %v1225 = vunpack.c.l.b16 %v304
    %v1226 = vunpack.c.h.b16 %v304
    %v1227 = vunpack.c.l.b16 %v305
    %v1228 = vunpack.c.h.b16 %v305
    %v1229 = vunpack.c.l.b16 %v306
    %v1230 = vunpack.c.h.b16 %v306
    %v1231 = vunpack.c.l.b16 %v307
    %v1232 = vunpack.c.h.b16 %v307
    %v1233 = vunpack.c.l.b16 %v308
    %v1234 = vunpack.c.h.b16 %v308
    %v1235 = vunpack.c.l.b16 %v309
    %v1236 = vunpack.c.h.b16 %v309
    %v1237 = vunpack.c.l.b16 %v310
    %v1238 = vunpack.c.h.b16 %v310
    %v1239 = vunpack.c.l.b16 %v311
    %v1240 = vunpack.c.h.b16 %v311
    %v1241 = vunpack.c.l.b16 %v312
    %v1242 = vunpack.c.h.b16 %v312
    %v1243 = vunpack.c.l.b16 %v313
    %v1244 = vunpack.c.h.b16 %v313
    %v1245 = vunpack.c.l.b16 %v314
    %v1246 = vunpack.c.h.b16 %v314
    %v1247 = vunpack.c.l.b16 %v315
    %v1248 = vunpack.c.h.b16 %v315
    %v1249 = vunpack.c.l.b16 %v316
    %v1250 = vunpack.c.h.b16 %v316
    %v1251 = vunpack.c.l.b16 %v317
    %v1252 = vunpack.c.h.b16 %v317
    %v1253 = vunpack.c.l.b16 %v318
    %v1254 = vunpack.c.h.b16 %v318
    %v1255 = vunpack.c.l.b16 %v319
    %v1256 = vunpack.c.h.b16 %v319
    %v1257 = vunpack.c.l.b16 %v320
    %v1258 = vunpack.c.h.b16 %v320
    %v1259 = vunpack.c.l.b16 %v321
    %v1260 = vunpack.c.h.b16 %v321
    %v1261 = vunpack.c.l.b16 %v322
    %v1262 = vunpack.c.h.b16 %v322
    %v1263 = vunpack.c.l.b16 %v323
    %v1264 = vunpack.c.h.b16 %v323
    %v1265 = vunpack.c.l.b16 %v324
    %v1266 = vunpack.c.h.b16 %v324
    %v1267 = vunpack.c.l.b16 %v325
    %v1268 = vunpack.c.h.b16 %v325
    %v1269 = vunpack.c.l.b16 %v326
    %v1270 = vunpack.c.h.b16 %v326
    %v1271 = vunpack.c.l.b16 %v327
    %v1272 = vunpack.c.h.b16 %v327
    %v1273 = vunpack.c.l.b16 %v328
    %v1274 = vunpack.c.h.b16 %v328
    %v1275 = vunpack.c.l.b16 %v329
    %v1276 = vunpack.c.h.b16 %v329
    %v1277 = vunpack.c.l.b16 %v330
    %v1278 = vunpack.c.h.b16 %v330
    %v1279 = vunpack.c.l.b16 %v331
    %v1280 = vunpack.c.h.b16 %v331
    %v1281 = vunpack.c.l.b16 %v332
    %v1282 = vunpack.c.h.b16 %v332
    %v1283 = vunpack.c.l.b16 %v333
    %v1284 = vunpack.c.h.b16 %v333
    %v1285 = vunpack.c.l.b16 %v334
    %v1286 = vunpack.c.h.b16 %v334
    %v1287 = vunpack.c.l.b16 %v335
    %v1288 = vunpack.c.h.b16 %v335
    %v1289 = vunpack.c.l.b16 %v336
    %v1290 = vunpack.c.h.b16 %v336
    %v1291 = vunpack.c.l.b16 %v337
    %v1292 = vunpack.c.h.b16 %v337
    %v1293 = vunpack.c.l.b16 %v338
    %v1294 = vunpack.c.h.b16 %v338
    %v1295 = vunpack.c.l.b16 %v339
    %v1296 = vunpack.c.h.b16 %v339
    %v1297 = vunpack.c.l.b16 %v340
    %v1298 = vunpack.c.h.b16 %v340
    %v1299 = vunpack.c.l.b16 %v341
    %v1300 = vunpack.c.h.b16 %v341
    %v1301 = vunpack.c.l.b16 %v342
    %v1302 = vunpack.c.h.b16 %v342
    %v1303 = vunpack.c.l.b16 %v343
    %v1304 = vunpack.c.h.b16 %v343
    %v1305 = vunpack.c.l.b16 %v344
    %v1306 = vunpack.c.h.b16 %v344
    %v1307 = vunpack.c.l.b16 %v345
    %v1308 = vunpack.c.h.b16 %v345
    %v1309 = vunpack.c.l.b16 %v346
    %v1310 = vunpack.c.h.b16 %v346
    %v1311 = vunpack.c.l.b16 %v347
    %v1312 = vunpack.c.h.b16 %v347
    %v1313 = vunpack.c.l.b16 %v348
    %v1314 = vunpack.c.h.b16 %v348
    %v1315 = vunpack.c.l.b16 %v349
    %v1316 = vunpack.c.h.b16 %v349
    %v1317 = vunpack.c.l.b16 %v350
    %v1318 = vunpack.c.h.b16 %v350
    %v1319 = vunpack.c.l.b16 %v351
    %v1320 = vunpack.c.h.b16 %v351
    %v1321 = vunpack.c.l.b16 %v352
    %v1322 = vunpack.c.h.b16 %v352
    %v1323 = vunpack.c.l.b16 %v353
    %v1324 = vunpack.c.h.b16 %v353
    %v1325 = vunpack.c.l.b16 %v354
    %v1326 = vunpack.c.h.b16 %v354
    %v1327 = vunpack.c.l.b16 %v355
    %v1328 = vunpack.c.h.b16 %v355
    %v1329 = vunpack.c.l.b16 %v356
    %v1330 = vunpack.c.h.b16 %v356
    %v1331 = vunpack.c.l.b16 %v357
    %v1332 = vunpack.c.h.b16 %v357
    %v1333 = vunpack.c.l.b16 %v358
    %v1334 = vunpack.c.h.b16 %v358
    %v1335 = vunpack.c.l.b16 %v359
    %v1336 = vunpack.c.h.b16 %v359
    %v1337 = vunpack.c.l.b16 %v360
    %v1338 = vunpack.c.h.b16 %v360
    %v1339 = vunpack.c.l.b16 %v361
    %v1340 = vunpack.c.h.b16 %v361
    %v1341 = vunpack.c.l.b16 %v362
    %v1342 = vunpack.c.h.b16 %v362
    %v1343 = vunpack.c.l.b16 %v363
    %v1344 = vunpack.c.h.b16 %v363
    %v1345 = vunpack.c.l.b16 %v364
    %v1346 = vunpack.c.h.b16 %v364
    %v1347 = vunpack.c.l.b16 %v365
    %v1348 = vunpack.c.h.b16 %v365
    %v1349 = vunpack.c.l.b16 %v366
    %v1350 = vunpack.c.h.b16 %v366
    %v1351 = vunpack.c.l.b16 %v367
    %v1352 = vunpack.c.h.b16 %v367
    %v1353 = vunpack.c.l.b16 %v368
    %v1354 = vunpack.c.h.b16 %v368
    %v1355 = vunpack.c.l.b16 %v369
    %v1356 = vunpack.c.h.b16 %v369
    %v1357 = vunpack.c.l.b16 %v370
    %v1358 = vunpack.c.h.b16 %v370
    %v1359 = vunpack.c.l.b16 %v371
    %v1360 = vunpack.c.h.b16 %v371
    %v1361 = vunpack.c.l.b16 %v372
    %v1362 = vunpack.c.h.b16 %v372
    %v1363 = vunpack.c.l.b16 %v373
    %v1364 = vunpack.c.h.b16 %v373
    %v1365 = vunpack.c.l.b16 %v374
    %v1366 = vunpack.c.h.b16 %v374
    %v1367 = vunpack.c.l.b16 %v375
    %v1368 = vunpack.c.h.b16 %v375
    %v1369 = vunpack.c.l.b16 %v376
    %v1370 = vunpack.c.h.b16 %v376
    %v1371 = vunpack.c.l.b16 %v377
    %v1372 = vunpack.c.h.b16 %v377
    %v1373 = vunpack.c.l.b16 %v378
    %v1374 = vunpack.c.h.b16 %v378
    %v1375 = vunpack.c.l.b16 %v379
    %v1376 = vunpack.c.h.b16 %v379
    %v1377 = vunpack.c.l.b16 %v380
    %v1378 = vunpack.c.h.b16 %v380
    %v1379 = vunpack.c.l.b16 %v381
    %v1380 = vunpack.c.h.b16 %v381
    %v1381 = vunpack.c.l.b16 %v382
    %v1382 = vunpack.c.h.b16 %v382
    %v1383 = vunpack.c.l.b16 %v383
    %v1384 = vunpack.c.h.b16 %v383
    %v1385 = vunpack.c.l.b16 %v384
    %v1386 = vunpack.c.h.b16 %v384
    %v1387 = vunpack.c.l.b16 %v385
    %v1388 = vunpack.c.h.b16 %v385
    %v1389 = vunpack.c.l.b16 %v386
    %v1390 = vunpack.c.h.b16 %v386
    %v1391 = vunpack.c.l.b16 %v387
    %v1392 = vunpack.c.h.b16 %v387
    %v1393 = vunpack.c.l.b16 %v388
    %v1394 = vunpack.c.h.b16 %v388
    %v1395 = vunpack.c.l.b16 %v389
    %v1396 = vunpack.c.h.b16 %v389
    %v1397 = vunpack.c.l.b16 %v390
    %v1398 = vunpack.c.h.b16 %v390
    %v1399 = vunpack.c.l.b16 %v391
    %v1400 = vunpack.c.h.b16 %v391
    %v1401 = vunpack.c.l.b16 %v392
    %v1402 = vunpack.c.h.b16 %v392
    %v1403 = vunpack.c.l.b16 %v393
    %v1404 = vunpack.c.h.b16 %v393
    %v1405 = vunpack.c.l.b16 %v394
    %v1406 = vunpack.c.h.b16 %v394
    %v1407 = vunpack.c.l.b16 %v395
    %v1408 = vunpack.c.h.b16 %v395
    %v1409 = vunpack.c.l.b16 %v396
    %v1410 = vunpack.c.h.b16 %v396
    %v1411 = vunpack.c.l.b16 %v397
    %v1412 = vunpack.c.h.b16 %v397
    %v1413 = vunpack.c.l.b16 %v398
    %v1414 = vunpack.c.h.b16 %v398
    %v1415 = vunpack.c.l.b16 %v399
    %v1416 = vunpack.c.h.b16 %v399
    %v1417 = vunpack.c.l.b16 %v400
    %v1418 = vunpack.c.h.b16 %v400
    %v1419 = vunpack.c.l.b16 %v401
    %v1420 = vunpack.c.h.b16 %v401
    %v1421 = vunpack.c.l.b16 %v402
    %v1422 = vunpack.c.h.b16 %v402
    %v1423 = vunpack.c.l.b16 %v403
    %v1424 = vunpack.c.h.b16 %v403
    %v1425 = vunpack.c.l.b16 %v404
    %v1426 = vunpack.c.h.b16 %v404
    %v1427 = vunpack.c.l.b16 %v405
    %v1428 = vunpack.c.h.b16 %v405
    %v1429 = vunpack.c.l.b16 %v406
    %v1430 = vunpack.c.h.b16 %v406
    %v1431 = vunpack.c.l.b16 %v407
    %v1432 = vunpack.c.h.b16 %v407
    %v1433 = vunpack.c.l.b16 %v408
    %v1434 = vunpack.c.h.b16 %v408
    %v1435 = vunpack.c.l.b16 %v409
    %v1436 = vunpack.c.h.b16 %v409
    %v1437 = vunpack.c.l.b16 %v410
    %v1438 = vunpack.c.h.b16 %v410
    %v1439 = vunpack.c.l.b16 %v411
    %v1440 = vunpack.c.h.b16 %v411
    %v1441 = vunpack.c.l.b16 %v412
    %v1442 = vunpack.c.h.b16 %v412
    %v1443 = vunpack.c.l.b16 %v413
    %v1444 = vunpack.c.h.b16 %v413
    %v1445 = vunpack.c.l.b16 %v414
    %v1446 = vunpack.c.h.b16 %v414
    %v1447 = vunpack.c.l.b16 %v415
    %v1448 = vunpack.c.h.b16 %v415
    %v1449 = vunpack.c.l.b16 %v416
    %v1450 = vunpack.c.h.b16 %v416
    %v1451 = vunpack.c.l.b16 %v417
    %v1452 = vunpack.c.h.b16 %v417
    %v1453 = vunpack.c.l.b16 %v418
    %v1454 = vunpack.c.h.b16 %v418
    %v1455 = vunpack.c.l.b16 %v419
    %v1456 = vunpack.c.h.b16 %v419
    %v1457 = vunpack.c.l.b16 %v420
    %v1458 = vunpack.c.h.b16 %v420
    %v1459 = vunpack.c.l.b16 %v421
    %v1460 = vunpack.c.h.b16 %v421
    %v1461 = vunpack.c.l.b16 %v422
    %v1462 = vunpack.c.h.b16 %v422
    %v1463 = vunpack.c.l.b16 %v423
    %v1464 = vunpack.c.h.b16 %v423
    %v1465 = vunpack.c.l.b16 %v424
    %v1466 = vunpack.c.h.b16 %v424
    %v1467 = vunpack.c.l.b16 %v425
    %v1468 = vunpack.c.h.b16 %v425
    %v1469 = vunpack.c.l.b16 %v426
    %v1470 = vunpack.c.h.b16 %v426
    %v1471 = vunpack.c.l.b16 %v427
    %v1472 = vunpack.c.h.b16 %v427
    %v1473 = vunpack.c.l.b16 %v428
    %v1474 = vunpack.c.h.b16 %v428
    %v1475 = vunpack.c.l.b16 %v429
    %v1476 = vunpack.c.h.b16 %v429
    %v1477 = vunpack.c.l.b16 %v430
    %v1478 = vunpack.c.h.b16 %v430
    %v1479 = vunpack.c.l.b16 %v431
    %v1480 = vunpack.c.h.b16 %v431
    %v1481 = vunpack.c.l.b16 %v432
    %v1482 = vunpack.c.h.b16 %v432
    %v1483 = vunpack.c.l.b16 %v433
    %v1484 = vunpack.c.h.b16 %v433
    %v1485 = vunpack.c.l.b16 %v434
    %v1486 = vunpack.c.h.b16 %v434
    %v1487 = vunpack.c.l.b16 %v435
    %v1488 = vunpack.c.h.b16 %v435
    %v1489 = vunpack.c.l.b16 %v436
    %v1490 = vunpack.c.h.b16 %v436
    %v1491 = vunpack.c.l.b16 %v437
    %v1492 = vunpack.c.h.b16 %v437
    %v1493 = vunpack.c.l.b16 %v438
    %v1494 = vunpack.c.h.b16 %v438
    %v1495 = vunpack.c.l.b16 %v439
    %v1496 = vunpack.c.h.b16 %v439
    %v1497 = vunpack.c.l.b16 %v440
    %v1498 = vunpack.c.h.b16 %v440
    %v1499 = vunpack.c.l.b16 %v441
    %v1500 = vunpack.c.h.b16 %v441
    %v1501 = vunpack.c.l.b16 %v442
    %v1502 = vunpack.c.h.b16 %v442
    %v1503 = vunpack.c.l.b16 %v443
    %v1504 = vunpack.c.h.b16 %v443
    %v1505 = vunpack.c.l.b16 %v444
    %v1506 = vunpack.c.h.b16 %v444
    %v1507 = vunpack.c.l.b16 %v445
    %v1508 = vunpack.c.h.b16 %v445
    %v1509 = vunpack.c.l.b16 %v446
    %v1510 = vunpack.c.h.b16 %v446
    %v1511 = vunpack.c.l.b16 %v447
    %v1512 = vunpack.c.h.b16 %v447
    %v1513 = vunpack.c.l.b16 %v448
    %v1514 = vunpack.c.h.b16 %v448
    %v1515 = vunpack.c.l.b16 %v449
    %v1516 = vunpack.c.h.b16 %v449
    %v1517 = vunpack.c.l.b16 %v450
    %v1518 = vunpack.c.h.b16 %v450
    %v1519 = vunpack.c.l.b16 %v451
    %v1520 = vunpack.c.h.b16 %v451
    %v1521 = vunpack.c.l.b16 %v452
    %v1522 = vunpack.c.h.b16 %v452
    %v1523 = vunpack.c.l.b16 %v453
    %v1524 = vunpack.c.h.b16 %v453
    %v1525 = vunpack.c.l.b16 %v454
    %v1526 = vunpack.c.h.b16 %v454
    %v1527 = vunpack.c.l.b16 %v455
    %v1528 = vunpack.c.h.b16 %v455
    %v1529 = vunpack.c.l.b16 %v456
    %v1530 = vunpack.c.h.b16 %v456
    %v1531 = vunpack.c.l.b16 %v457
    %v1532 = vunpack.c.h.b16 %v457
    %v1533 = vunpack.c.l.b16 %v458
    %v1534 = vunpack.c.h.b16 %v458
    %v1535 = vunpack.c.l.b16 %v459
    %v1536 = vunpack.c.h.b16 %v459
    %v1537 = vunpack.c.l.b16 %v460
    %v1538 = vunpack.c.h.b16 %v460
    %v1539 = vunpack.c.l.b16 %v461
    %v1540 = vunpack.c.h.b16 %v461
    %v1541 = vunpack.c.l.b16 %v462
    %v1542 = vunpack.c.h.b16 %v462
    %v1543 = vunpack.c.l.b16 %v463
    %v1544 = vunpack.c.h.b16 %v463
    %v1545 = vunpack.c.l.b16 %v464
    %v1546 = vunpack.c.h.b16 %v464
    %v1547 = vunpack.c.l.b16 %v465
    %v1548 = vunpack.c.h.b16 %v465
    %v1549 = vunpack.c.l.b16 %v466
    %v1550 = vunpack.c.h.b16 %v466
    %v1551 = vunpack.c.l.b16 %v467
    %v1552 = vunpack.c.h.b16 %v467
    %v1553 = vunpack.c.l.b16 %v468
    %v1554 = vunpack.c.h.b16 %v468
    %v1555 = vunpack.c.l.b16 %v469
    %v1556 = vunpack.c.h.b16 %v469
    %v1557 = vunpack.c.l.b16 %v470
    %v1558 = vunpack.c.h.b16 %v470
    %v1559 = vunpack.c.l.b16 %v471
    %v1560 = vunpack.c.h.b16 %v471
    %v1561 = vunpack.c.l.b16 %v472
    %v1562 = vunpack.c.h.b16 %v472
    %v1563 = vunpack.c.l.b16 %v473
    %v1564 = vunpack.c.h.b16 %v473
    %v1565 = vunpack.c.l.b16 %v474
    %v1566 = vunpack.c.h.b16 %v474
    %v1567 = vunpack.c.l.b16 %v475
    %v1568 = vunpack.c.h.b16 %v475
    %v1569 = vunpack.c.l.b16 %v476
    %v1570 = vunpack.c.h.b16 %v476
    %v1571 = vunpack.c.l.b16 %v477
    %v1572 = vunpack.c.h.b16 %v477
    %v1573 = vunpack.c.l.b16 %v478
    %v1574 = vunpack.c.h.b16 %v478
    %v1575 = vunpack.c.l.b16 %v479
    %v1576 = vunpack.c.h.b16 %v479
    %v1577 = vunpack.c.l.b16 %v480
    %v1578 = vunpack.c.h.b16 %v480
    %v1579 = vunpack.c.l.b16 %v481
    %v1580 = vunpack.c.h.b16 %v481
    %v1581 = vunpack.c.l.b16 %v482
    %v1582 = vunpack.c.h.b16 %v482
    %v1583 = vunpack.c.l.b16 %v483
    %v1584 = vunpack.c.h.b16 %v483
    %v1585 = vunpack.c.l.b16 %v484
    %v1586 = vunpack.c.h.b16 %v484
    %v1587 = vunpack.c.l.b16 %v485
    %v1588 = vunpack.c.h.b16 %v485
    %v1589 = vunpack.c.l.b16 %v486
    %v1590 = vunpack.c.h.b16 %v486
    %v1591 = vunpack.c.l.b16 %v487
    %v1592 = vunpack.c.h.b16 %v487
    %v1593 = vunpack.c.l.b16 %v488
    %v1594 = vunpack.c.h.b16 %v488
    %v1595 = vunpack.c.l.b16 %v489
    %v1596 = vunpack.c.h.b16 %v489
    %v1597 = vunpack.c.l.b16 %v490
    %v1598 = vunpack.c.h.b16 %v490
    %v1599 = vunpack.c.l.b16 %v491
    %v1600 = vunpack.c.h.b16 %v491
    %v1601 = vunpack.c.l.b16 %v492
    %v1602 = vunpack.c.h.b16 %v492
    %v1603 = vunpack.c.l.b16 %v493
    %v1604 = vunpack.c.h.b16 %v493
    %v1605 = vunpack.c.l.b16 %v494
    %v1606 = vunpack.c.h.b16 %v494
    %v1607 = vunpack.c.l.b16 %v495
    %v1608 = vunpack.c.h.b16 %v495
    %v1609 = vunpack.c.l.b16 %v496
    %v1610 = vunpack.c.h.b16 %v496
    %v1611 = vunpack.c.l.b16 %v497
    %v1612 = vunpack.c.h.b16 %v497
    %v1613 = vunpack.c.l.b16 %v498
    %v1614 = vunpack.c.h.b16 %v498
    %v1615 = vunpack.c.l.b16 %v499
    %v1616 = vunpack.c.h.b16 %v499
    %v1617 = vunpack.c.l.b16 %v500
    %v1618 = vunpack.c.h.b16 %v500
    %v1619 = vunpack.c.l.b16 %v501
    %v1620 = vunpack.c.h.b16 %v501
    %v1621 = vunpack.c.l.b16 %v502
    %v1622 = vunpack.c.h.b16 %v502
    %v1623 = vunpack.c.l.b16 %v503
    %v1624 = vunpack.c.h.b16 %v503
    %v1625 = vunpack.c.l.b16 %v504
    %v1626 = vunpack.c.h.b16 %v504
    %v1627 = vunpack.c.l.b16 %v505
    %v1628 = vunpack.c.h.b16 %v505
    %v1629 = vunpack.c.l.b16 %v506
    %v1630 = vunpack.c.h.b16 %v506
    %v1631 = vunpack.c.l.b16 %v507
    %v1632 = vunpack.c.h.b16 %v507
    %v1633 = vunpack.c.l.b16 %v508
    %v1634 = vunpack.c.h.b16 %v508
    %v1635 = vunpack.c.l.b16 %v509
    %v1636 = vunpack.c.h.b16 %v509
    %v1637 = vunpack.c.l.b16 %v510
    %v1638 = vunpack.c.h.b16 %v510
    %v1639 = vunpack.c.l.b16 %v511
    %v1640 = vunpack.c.h.b16 %v511
    %v1641 = vunpack.c.l.b16 %v512
    %v1642 = vunpack.c.h.b16 %v512
    %v1643 = vunpack.c.l.b16 %v513
    %v1644 = vunpack.c.h.b16 %v513
    %v1645 = vunpack.c.l.b16 %v514
    %v1646 = vunpack.c.h.b16 %v514
    %v1647 = vunpack.c.l.b16 %v515
    %v1648 = vunpack.c.h.b16 %v515
    %v1649 = vunpack.c.l.b16 %v516
    %v1650 = vunpack.c.h.b16 %v516
    %v1651 = vunpack.c.l.b16 %v517
    %v1652 = vunpack.c.h.b16 %v517
    %v1653 = vunpack.c.l.b16 %v518
    %v1654 = vunpack.c.h.b16 %v518
    %v1655 = vunpack.c.l.b16 %v519
    %v1656 = vunpack.c.h.b16 %v519
    %v1657 = vunpack.c.l.b16 %v520
    %v1658 = vunpack.c.h.b16 %v520
    %v1659 = vunpack.c.l.b16 %v521
    %v1660 = vunpack.c.h.b16 %v521
    %v1661 = vunpack.c.l.b16 %v522
    %v1662 = vunpack.c.h.b16 %v522
    %v1663 = vunpack.c.l.b16 %v523
    %v1664 = vunpack.c.h.b16 %v523
    %v1665 = vunpack.c.l.b16 %v524
    %v1666 = vunpack.c.h.b16 %v524
    %v1667 = vunpack.c.l.b16 %v525
    %v1668 = vunpack.c.h.b16 %v525
    %v1669 = vunpack.c.l.b16 %v526
    %v1670 = vunpack.c.h.b16 %v526
    %v1671 = vunpack.c.l.b16 %v527
    %v1672 = vunpack.c.h.b16 %v527
    %v1673 = vunpack.c.l.b16 %v528
    %v1674 = vunpack.c.h.b16 %v528
    %v1675 = vunpack.c.l.b16 %v529
    %v1676 = vunpack.c.h.b16 %v529
    %v1677 = vunpack.c.l.b16 %v530
    %v1678 = vunpack.c.h.b16 %v530
    %v1679 = vunpack.c.l.b16 %v531
    %v1680 = vunpack.c.h.b16 %v531
    %v1681 = vunpack.c.l.b16 %v532
    %v1682 = vunpack.c.h.b16 %v532
    %v1683 = vunpack.c.l.b16 %v533
    %v1684 = vunpack.c.h.b16 %v533
    %v1685 = vunpack.c.l.b16 %v534
    %v1686 = vunpack.c.h.b16 %v534
    %v1687 = vunpack.c.l.b16 %v535
    %v1688 = vunpack.c.h.b16 %v535
    %v1689 = vunpack.c.l.b16 %v536
    %v1690 = vunpack.c.h.b16 %v536
    %v1691 = vunpack.c.l.b16 %v537
    %v1692 = vunpack.c.h.b16 %v537
    %v1693 = vunpack.c.l.b16 %v538
    %v1694 = vunpack.c.h.b16 %v538
    %v1695 = vunpack.c.l.b16 %v539
    %v1696 = vunpack.c.h.b16 %v539
    %v1697 = vunpack.c.l.b16 %v540
    %v1698 = vunpack.c.h.b16 %v540
    %v1699 = vunpack.c.l.b16 %v541
    %v1700 = vunpack.c.h.b16 %v541
    %v1701 = vunpack.c.l.b16 %v542
    %v1702 = vunpack.c.h.b16 %v542
    %v1703 = vunpack.c.l.b16 %v543
    %v1704 = vunpack.c.h.b16 %v543
    %v1705 = vunpack.c.l.b16 %v544
    %v1706 = vunpack.c.h.b16 %v544
    %v1707 = vunpack.c.l.b16 %v545
    %v1708 = vunpack.c.h.b16 %v545
    %v1709 = vunpack.c.l.b16 %v546
    %v1710 = vunpack.c.h.b16 %v546
    %v1711 = vpack.c.b16 %v945, %v943
    %v1712 = vpack.c.b16 %v946, %v944
    %v1713 = vpack.c.b16 %v949, %v947
    %v1714 = vpack.c.b16 %v950, %v948
    %v1715 = vpack.c.b16 %v953, %v951
    %v1716 = vpack.c.b16 %v954, %v952
    %v1717 = vpack.c.b16 %v957, %v955
    %v1718 = vpack.c.b16 %v958, %v956
    %v1719 = vpack.c.b16 %v961, %v959
    %v1720 = vpack.c.b16 %v962, %v960
    %v1721 = vpack.c.b16 %v965, %v963
    %v1722 = vpack.c.b16 %v966, %v964
    %v1723 = vpack.c.b16 %v969, %v967
    %v1724 = vpack.c.b16 %v970, %v968
    %v1725 = vpack.c.b16 %v973, %v971
    %v1726 = vpack.c.b16 %v974, %v972
    %v1727 = vpack.c.b16 %v977, %v975
    %v1728 = vpack.c.b16 %v978, %v976
    %v1729 = vpack.c.b16 %v981, %v979
    %v1730 = vpack.c.b16 %v982, %v980
    %v1731 = vpack.c.b16 %v985, %v983
    %v1732 = vpack.c.b16 %v986, %v984
    %v1733 = vpack.c.b16 %v989, %v987
    %v1734 = vpack.c.b16 %v990, %v988
    %v1735 = vpack.c.b16 %v993, %v991
    %v1736 = vpack.c.b16 %v994, %v992
    %v1737 = vpack.c.b16 %v997, %v995
    %v1738 = vpack.c.b16 %v998, %v996
    %v1739 = vpack.c.b16 %v1001, %v999
    %v1740 = vpack.c.b16 %v1002, %v1000
    %v1741 = vpack.c.b16 %v1005, %v1003
    %v1742 = vpack.c.b16 %v1006, %v1004
    %v1743 = vpack.c.b16 %v1009, %v1007
    %v1744 = vpack.c.b16 %v1010, %v1008
    %v1745 = vpack.c.b16 %v1013, %v1011
    %v1746 = vpack.c.b16 %v1014, %v1012
    %v1747 = vpack.c.b16 %v1017, %v1015
    %v1748 = vpack.c.b16 %v1018, %v1016
    %v1749 = vpack.c.b16 %v1021, %v1019
    %v1750 = vpack.c.b16 %v1022, %v1020
    %v1751 = vpack.c.b16 %v1025, %v1023
    %v1752 = vpack.c.b16 %v1026, %v1024
    %v1753 = vpack.c.b16 %v1029, %v1027
    %v1754 = vpack.c.b16 %v1030, %v1028
    %v1755 = vpack.c.b16 %v1033, %v1031
    %v1756 = vpack.c.b16 %v1034, %v1032
    %v1757 = vpack.c.b16 %v1037, %v1035
    %v1758 = vpack.c.b16 %v1038, %v1036
    %v1759 = vpack.c.b16 %v1041, %v1039
    %v1760 = vpack.c.b16 %v1042, %v1040
    %v1761 = vpack.c.b16 %v1045, %v1043
    %v1762 = vpack.c.b16 %v1046, %v1044
    %v1763 = vpack.c.b16 %v1049, %v1047
    %v1764 = vpack.c.b16 %v1050, %v1048
    %v1765 = vpack.c.b16 %v1053, %v1051
    %v1766 = vpack.c.b16 %v1054, %v1052
    %v1767 = vpack.c.b16 %v1057, %v1055
    %v1768 = vpack.c.b16 %v1058, %v1056
    %v1769 = vpack.c.b16 %v1061, %v1059
    %v1770 = vpack.c.b16 %v1062, %v1060
    %v1771 = vpack.c.b16 %v1065, %v1063
    %v1772 = vpack.c.b16 %v1066, %v1064
    %v1773 = vpack.c.b16 %v1069, %v1067
    %v1774 = vpack.c.b16 %v1070, %v1068
    %v1775 = vpack.c.b16 %v1073, %v1071
    %v1776 = vpack.c.b16 %v1074, %v1072
    %v1777 = vpack.c.b16 %v1077, %v1075
    %v1778 = vpack.c.b16 %v1078, %v1076
    %v1779 = vpack.c.b16 %v1081, %v1079
    %v1780 = vpack.c.b16 %v1082, %v1080
    %v1781 = vpack.c.b16 %v1085, %v1083
    %v1782 = vpack.c.b16 %v1086, %v1084
    %v1783 = vpack.c.b16 %v1089, %v1087
    %v1784 = vpack.c.b16 %v1090, %v1088
    %v1785 = vpack.c.b16 %v1093, %v1091
    %v1786 = vpack.c.b16 %v1094, %v1092
    %v1787 = vpack.c.b16 %v1097, %v1095
    %v1788 = vpack.c.b16 %v1098, %v1096
    %v1789 = vpack.c.b16 %v1101, %v1099
    %v1790 = vpack.c.b16 %v1102, %v1100
    %v1791 = vpack.c.b16 %v1105, %v1103
    %v1792 = vpack.c.b16 %v1106, %v1104
    %v1793 = vpack.c.b16 %v1109, %v1107
    %v1794 = vpack.c.b16 %v1110, %v1108
    %v1795 = vpack.c.b16 %v1113, %v1111
    %v1796 = vpack.c.b16 %v1114, %v1112
    %v1797 = vpack.c.b16 %v1117, %v1115
    %v1798 = vpack.c.b16 %v1118, %v1116
    %v1799 = vpack.c.b16 %v1121, %v1119
    %v1800 = vpack.c.b16 %v1122, %v1120
    %v1801 = vpack.c.b16 %v1125, %v1123
    %v1802 = vpack.c.b16 %v1126, %v1124
    %v1803 = vpack.c.b16 %v1129, %v1127
    %v1804 = vpack.c.b16 %v1130, %v1128
    %v1805 = vpack.c.b16 %v1133, %v1131
    %v1806 = vpack.c.b16 %v1134, %v1132
    %v1807 = vpack.c.b16 %v1137, %v1135
    %v1808 = vpack.c.b16 %v1138, %v1136
    %v1809 = vpack.c.b16 %v1141, %v1139
    %v1810 = vpack.c.b16 %v1142, %v1140
    %v1811 = vpack.c.b16 %v1145, %v1143
    %v1812 = vpack.c.b16 %v1146, %v1144
    %v1813 = vpack.c.b16 %v1149, %v1147
    %v1814 = vpack.c.b16 %v1150, %v1148
    %v1815 = vpack.c.b16 %v1153, %v1151
    %v1816 = vpack.c.b16 %v1154, %v1152
    %v1817 = vpack.c.b16 %v1157, %v1155
    %v1818 = vpack.c.b16 %v1158, %v1156
    %v1819 = vpack.c.b16 %v1161, %v1159
    %v1820 = vpack.c.b16 %v1162, %v1160
    %v1821 = vpack.c.b16 %v1165, %v1163
    %v1822 = vpack.c.b16 %v1166, %v1164
    %v1823 = vpack.c.b16 %v1169, %v1167
    %v1824 = vpack.c.b16 %v1170, %v1168
    %v1825 = vpack.c.b16 %v1173, %v1171
    %v1826 = vpack.c.b16 %v1174, %v1172
    %v1827 = vpack.c.b16 %v1177, %v1175
    %v1828 = vpack.c.b16 %v1178, %v1176
    %v1829 = vpack.c.b16 %v1181, %v1179
    %v1830 = vpack.c.b16 %v1182, %v1180
    %v1831 = vpack.c.b16 %v1185, %v1183
    %v1832 = vpack.c.b16 %v1186, %v1184
    %v1833 = vpack.c.b16 %v1189, %v1187
    %v1834 = vpack.c.b16 %v1190, %v1188
    %v1835 = vpack.c.b16 %v1193, %v1191
    %v1836 = vpack.c.b16 %v1194, %v1192
    %v1837 = vpack.c.b16 %v1197, %v1195
    %v1838 = vpack.c.b16 %v1198, %v1196
    %v1839 = vpack.c.b16 %v1201, %v1199
    %v1840 = vpack.c.b16 %v1202, %v1200
    %v1841 = vpack.c.b16 %v1205, %v1203
    %v1842 = vpack.c.b16 %v1206, %v1204
    %v1843 = vpack.c.b16 %v1209, %v1207
    %v1844 = vpack.c.b16 %v1210, %v1208
    %v1845 = vpack.c.b16 %v1213, %v1211
    %v1846 = vpack.c.b16 %v1214, %v1212
    %v1847 = vpack.c.b16 %v1217, %v1215
    %v1848 = vpack.c.b16 %v1218, %v1216
    %v1849 = vpack.c.b16 %v1221, %v1219
    %v1850 = vpack.c.b16 %v1222, %v1220
    %v1851 = vpack.c.b16 %v1225, %v1223
    %v1852 = vpack.c.b16 %v1226, %v1224
    %v1853 = vpack.c.b16 %v1229, %v1227
    %v1854 = vpack.c.b16 %v1230, %v1228
    %v1855 = vpack.c.b16 %v1233, %v1231
    %v1856 = vpack.c.b16 %v1234, %v1232
    %v1857 = vpack.c.b16 %v1237, %v1235
    %v1858 = vpack.c.b16 %v1238, %v1236
    %v1859 = vpack.c.b16 %v1241, %v1239
    %v1860 = vpack.c.b16 %v1242, %v1240
    %v1861 = vpack.c.b16 %v1245, %v1243
    %v1862 = vpack.c.b16 %v1246, %v1244
    %v1863 = vpack.c.b16 %v1249, %v1247
    %v1864 = vpack.c.b16 %v1250, %v1248
    %v1865 = vpack.c.b16 %v1253, %v1251
    %v1866 = vpack.c.b16 %v1254, %v1252
    %v1867 = vpack.c.b16 %v1257, %v1255
    %v1868 = vpack.c.b16 %v1258, %v1256
    %v1869 = vpack.c.b16 %v1261, %v1259
    %v1870 = vpack.c.b16 %v1262, %v1260
    %v1871 = vpack.c.b16 %v1265, %v1263
    %v1872 = vpack.c.b16 %v1266, %v1264
    %v1873 = vpack.c.b16 %v1269, %v1267
    %v1874 = vpack.c.b16 %v1270, %v1268
    %v1875 = vpack.c.b16 %v1273, %v1271
    %v1876 = vpack.c.b16 %v1274, %v1272
    %v1877 = vpack.c.b16 %v1277, %v1275
    %v1878 = vpack.c.b16 %v1278, %v1276
    %v1879 = vpack.c.b16 %v1281, %v1279
    %v1880 = vpack.c.b16 %v1282, %v1280
    %v1881 = vpack.c.b16 %v1285, %v1283
    %v1882 = vpack.c.b16 %v1286, %v1284
    %v1883 = vpack.c.b16 %v1289, %v1287
    %v1884 = vpack.c.b16 %v1290, %v1288
    %v1885 = vpack.c.b16 %v1293, %v1291
    %v1886 = vpack.c.b16 %v1294, %v1292
    %v1887 = vpack.c.b16 %v1297, %v1295
    %v1888 = vpack.c.b16 %v1298, %v1296
    %v1889 = vpack.c.b16 %v1301, %v1299
    %v1890 = vpack.c.b16 %v1302, %v1300
    %v1891 = vpack.c.b16 %v1305, %v1303
    %v1892 = vpack.c.b16 %v1306, %v1304
    %v1893 = vpack.c.b16 %v1309, %v1307
    %v1894 = vpack.c.b16 %v1310, %v1308
    %v1895 = vpack.c.b16 %v1313, %v1311
    %v1896 = vpack.c.b16 %v1314, %v1312
    %v1897 = vpack.c.b16 %v1317, %v1315
    %v1898 = vpack.c.b16 %v1318, %v1316
    %v1899 = vpack.c.b16 %v1321, %v1319
    %v1900 = vpack.c.b16 %v1322, %v1320
    %v1901 = vpack.c.b16 %v1325, %v1323
    %v1902 = vpack.c.b16 %v1326, %v1324
    %v1903 = vpack.c.b16 %v1329, %v1327
    %v1904 = vpack.c.b16 %v1330, %v1328
    %v1905 = vpack.c.b16 %v1333, %v1331
    %v1906 = vpack.c.b16 %v1334, %v1332
    %v1907 = vpack.c.b16 %v1337, %v1335
    %v1908 = vpack.c.b16 %v1338, %v1336
    %v1909 = vpack.c.b16 %v1341, %v1339
    %v1910 = vpack.c.b16 %v1342, %v1340
    %v1911 = vpack.c.b16 %v1345, %v1343
    %v1912 = vpack.c.b16 %v1346, %v1344
    %v1913 = vpack.c.b16 %v1349, %v1347
    %v1914 = vpack.c.b16 %v1350, %v1348
    %v1915 = vpack.c.b16 %v1353, %v1351
    %v1916 = vpack.c.b16 %v1354, %v1352
    %v1917 = vpack.c.b16 %v1357, %v1355
    %v1918 = vpack.c.b16 %v1358, %v1356
    %v1919 = vpack.c.b16 %v1361, %v1359
    %v1920 = vpack.c.b16 %v1362, %v1360
    %v1921 = vpack.c.b16 %v1365, %v1363
    %v1922 = vpack.c.b16 %v1366, %v1364
    %v1923 = vpack.c.b16 %v1369, %v1367
    %v1924 = vpack.c.b16 %v1370, %v1368
    %v1925 = vpack.c.b16 %v1373, %v1371
    %v1926 = vpack.c.b16 %v1374, %v1372
    %v1927 = vpack.c.b16 %v1377, %v1375
    %v1928 = vpack.c.b16 %v1378, %v1376
    %v1929 = vpack.c.b16 %v1381, %v1379
    %v1930 = vpack.c.b16 %v1382, %v1380
    %v1931 = vpack.c.b16 %v1385, %v1383
    %v1932 = vpack.c.b16 %v1386, %v1384
    %v1933 = vpack.c.b16 %v1389, %v1387
    %v1934 = vpack.c.b16 %v1390, %v1388
    %v1935 = vpack.c.b16 %v1393, %v1391
    %v1936 = vpack.c.b16 %v1394, %v1392
    %v1937 = vpack.c.b16 %v1397, %v1395
    %v1938 = vpack.c.b16 %v1398, %v1396
    %v1939 = vpack.c.b16 %v1401, %v1399
    %v1940 = vpack.c.b16 %v1402, %v1400
    %v1941 = vpack.c.b16 %v1405, %v1403
    %v1942 = vpack.c.b16 %v1406, %v1404
    %v1943 = vpack.c.b16 %v1409, %v1407
    %v1944 = vpack.c.b16 %v1410, %v1408
    %v1945 = vpack.c.b16 %v1413, %v1411
    %v1946 = vpack.c.b16 %v1414, %v1412
    %v1947 = vpack.c.b16 %v1417, %v1415
    %v1948 = vpack.c.b16 %v1418, %v1416
    %v1949 = vpack.c.b16 %v1421, %v1419
    %v1950 = vpack.c.b16 %v1422, %v1420
    %v1951 = vpack.c.b16 %v1425, %v1423
    %v1952 = vpack.c.b16 %v1426, %v1424
    %v1953 = vpack.c.b16 %v1429, %v1427
    %v1954 = vpack.c.b16 %v1430, %v1428
    %v1955 = vpack.c.b16 %v1433, %v1431
    %v1956 = vpack.c.b16 %v1434, %v1432
    %v1957 = vpack.c.b16 %v1437, %v1435
    %v1958 = vpack.c.b16 %v1438, %v1436
    %v1959 = vpack.c.b16 %v1441, %v1439
    %v1960 = vpack.c.b16 %v1442, %v1440
    %v1961 = vpack.c.b16 %v1445, %v1443
    %v1962 = vpack.c.b16 %v1446, %v1444
    %v1963 = vpack.c.b16 %v1449, %v1447
    %v1964 = vpack.c.b16 %v1450, %v1448
    %v1965 = vpack.c.b16 %v1453, %v1451
    %v1966 = vpack.c.b16 %v1454, %v1452
    %v1967 = vpack.c.b16 %v1457, %v1455
    %v1968 = vpack.c.b16 %v1458, %v1456
    %v1969 = vpack.c.b16 %v1461, %v1459
    %v1970 = vpack.c.b16 %v1462, %v1460
    %v1971 = vpack.c.b16 %v1465, %v1463
    %v1972 = vpack.c.b16 %v1466, %v1464
    %v1973 = vpack.c.b16 %v1469, %v1467
    %v1974 = vpack.c.b16 %v1470, %v1468
    %v1975 = vpack.c.b16 %v1473, %v1471
    %v1976 = vpack.c.b16 %v1474, %v1472
    %v1977 = vpack.c.b16 %v1477, %v1475
    %v1978 = vpack.c.b16 %v1478, %v1476
    %v1979 = vpack.c.b16 %v1481, %v1479
    %v1980 = vpack.c.b16 %v1482, %v1480
    %v1981 = vpack.c.b16 %v1485, %v1483
    %v1982 = vpack.c.b16 %v1486, %v1484
    %v1983 = vpack.c.b16 %v1489, %v1487
    %v1984 = vpack.c.b16 %v1490, %v1488
    %v1985 = vpack.c.b16 %v1493, %v1491
    %v1986 = vpack.c.b16 %v1494, %v1492
    %v1987 = vpack.c.b16 %v1497, %v1495
    %v1988 = vpack.c.b16 %v1498, %v1496
    %v1989 = vpack.c.b16 %v1501, %v1499
    %v1990 = vpack.c.b16 %v1502, %v1500
    %v1991 = vpack.c.b16 %v1505, %v1503
    %v1992 = vpack.c.b16 %v1506, %v1504
    %v1993 = vpack.c.b16 %v1509, %v1507
    %v1994 = vpack.c.b16 %v1510, %v1508
    %v1995 = vpack.c.b16 %v1513, %v1511
    %v1996 = vpack.c.b16 %v1514, %v1512
    %v1997 = vpack.c.b16 %v1517, %v1515
    %v1998 = vpack.c.b16 %v1518, %v1516
    %v1999 = vpack.c.b16 %v1521, %v1519
    %v2000 = vpack.c.b16 %v1522, %v1520
    %v2001 = vpack.c.b16 %v1525, %v1523
    %v2002 = vpack.c.b16 %v1526, %v1524
    %v2003 = vpack.c.b16 %v1529, %v1527
    %v2004 = vpack.c.b16 %v1530, %v1528
    %v2005 = vpack.c.b16 %v1533, %v1531
    %v2006 = vpack.c.b16 %v1534, %v1532
    %v2007 = vpack.c.b16 %v1537, %v1535
    %v2008 = vpack.c.b16 %v1538, %v1536
    %v2009 = vpack.c.b16 %v1541, %v1539
    %v2010 = vpack.c.b16 %v1542, %v1540
    %v2011 = vpack.c.b16 %v1545, %v1543
    %v2012 = vpack.c.b16 %v1546, %v1544
    %v2013 = vpack.c.b16 %v1549, %v1547
    %v2014 = vpack.c.b16 %v1550, %v1548
    %v2015 = vpack.c.b16 %v1553, %v1551
    %v2016 = vpack.c.b16 %v1554, %v1552
    %v2017 = vpack.c.b16 %v1557, %v1555
    %v2018 = vpack.c.b16 %v1558, %v1556
    %v2019 = vpack.c.b16 %v1561, %v1559
    %v2020 = vpack.c.b16 %v1562, %v1560
    %v2021 = vpack.c.b16 %v1565, %v1563
    %v2022 = vpack.c.b16 %v1566, %v1564
    %v2023 = vpack.c.b16 %v1569, %v1567
    %v2024 = vpack.c.b16 %v1570, %v1568
    %v2025 = vpack.c.b16 %v1573, %v1571
    %v2026 = vpack.c.b16 %v1574, %v1572
    %v2027 = vpack.c.b16 %v1577, %v1575
    %v2028 = vpack.c.b16 %v1578, %v1576
    %v2029 = vpack.c.b16 %v1581, %v1579
    %v2030 = vpack.c.b16 %v1582, %v1580
    %v2031 = vpack.c.b16 %v1585, %v1583
    %v2032 = vpack.c.b16 %v1586, %v1584
    %v2033 = vpack.c.b16 %v1589, %v1587
    %v2034 = vpack.c.b16 %v1590, %v1588
    %v2035 = vpack.c.b16 %v1593, %v1591
    %v2036 = vpack.c.b16 %v1594, %v1592
    %v2037 = vpack.c.b16 %v1597, %v1595
    %v2038 = vpack.c.b16 %v1598, %v1596
    %v2039 = vpack.c.b16 %v1601, %v1599
    %v2040 = vpack.c.b16 %v1602, %v1600
    %v2041 = vpack.c.b16 %v1605, %v1603
    %v2042 = vpack.c.b16 %v1606, %v1604
    %v2043 = vpack.c.b16 %v1609, %v1607
    %v2044 = vpack.c.b16 %v1610, %v1608
    %v2045 = vpack.c.b16 %v1613, %v1611
    %v2046 = vpack.c.b16 %v1614, %v1612
    %v2047 = vpack.c.b16 %v1617, %v1615
    %v2048 = vpack.c.b16 %v1618, %v1616
    %v2049 = vpack.c.b16 %v1621, %v1619
    %v2050 = vpack.c.b16 %v1622, %v1620
    %v2051 = vpack.c.b16 %v1625, %v1623
    %v2052 = vpack.c.b16 %v1626, %v1624
    %v2053 = vpack.c.b16 %v1629, %v1627
    %v2054 = vpack.c.b16 %v1630, %v1628
    %v2055 = vpack.c.b16 %v1633, %v1631
    %v2056 = vpack.c.b16 %v1634, %v1632
    %v2057 = vpack.c.b16 %v1637, %v1635
    %v2058 = vpack.c.b16 %v1638, %v1636
    %v2059 = vpack.c.b16 %v1641, %v1639
    %v2060 = vpack.c.b16 %v1642, %v1640
    %v2061 = vpack.c.b16 %v1645, %v1643
    %v2062 = vpack.c.b16 %v1646, %v1644
    %v2063 = vpack.c.b16 %v1649, %v1647
    %v2064 = vpack.c.b16 %v1650, %v1648
    %v2065 = vpack.c.b16 %v1653, %v1651
    %v2066 = vpack.c.b16 %v1654, %v1652
    %v2067 = vpack.c.b16 %v1657, %v1655
    %v2068 = vpack.c.b16 %v1658, %v1656
    %v2069 = vpack.c.b16 %v1661, %v1659
    %v2070 = vpack.c.b16 %v1662, %v1660
    %v2071 = vpack.c.b16 %v1665, %v1663
    %v2072 = vpack.c.b16 %v1666, %v1664
    %v2073 = vpack.c.b16 %v1669, %v1667
    %v2074 = vpack.c.b16 %v1670, %v1668
    %v2075 = vpack.c.b16 %v1673, %v1671
    %v2076 = vpack.c.b16 %v1674, %v1672
    %v2077 = vpack.c.b16 %v1677, %v1675
    %v2078 = vpack.c.b16 %v1678, %v1676
    %v2079 = vpack.c.b16 %v1681, %v1679
    %v2080 = vpack.c.b16 %v1682, %v1680
    %v2081 = vpack.c.b16 %v1685, %v1683
    %v2082 = vpack.c.b16 %v1686, %v1684
    %v2083 = vpack.c.b16 %v1689, %v1687
    %v2084 = vpack.c.b16 %v1690, %v1688
    %v2085 = vpack.c.b16 %v1693, %v1691
    %v2086 = vpack.c.b16 %v1694, %v1692
    %v2087 = vpack.c.b16 %v1697, %v1695
    %v2088 = vpack.c.b16 %v1698, %v1696
    %v2089 = vpack.c.b16 %v1701, %v1699
    %v2090 = vpack.c.b16 %v1702, %v1700
    %v2091 = vpack.c.b16 %v1705, %v1703
    %v2092 = vpack.c.b16 %v1706, %v1704
    %v2093 = vpack.c.b16 %v1709, %v1707
    %v2094 = vpack.c.b16 %v1710, %v1708
    %2479 = vmatprep.subr.bf16.mxu0 %v1726
    %2480 = vmatpush1.bf16.msra.mxu0 %v1725
    %2481 = vmatprep.subr.bf16.mxu0 %v1724
    %2482 = vmatpush1.bf16.msra.mxu0 %v1723
    %2483 = vmatprep.subr.bf16.mxu0 %v1722
    %2484 = vmatpush1.bf16.msra.mxu0 %v1721
    %2485 = vmatprep.subr.bf16.mxu0 %v1720
    %2486 = vmatpush1.bf16.msra.mxu0 %v1719
    %2487 = vmatprep.subr.bf16.mxu0 %v1718
    %2488 = vmatpush1.bf16.msra.mxu0 %v1717
    %2489 = vmatprep.subr.bf16.mxu0 %v1716
    %2490 = vmatpush1.bf16.msra.mxu0 %v1715
    %2491 = vmatprep.subr.bf16.mxu0 %v1714
    %2492 = vmatpush1.bf16.msra.mxu0 %v1713
    %2493 = vmatprep.subr.bf16.mxu0 %v1712
    %2494 = vmatpush1.bf16.msra.mxu0 %v1711
    %2495 = vmatprep.subr.bf16.mxu0 %v1742
    %2496 = vmatpush2.bf16.msra.mxu0 %v1741
    %2497 = vmatprep.subr.bf16.mxu0 %v1740
    %2498 = vmatpush2.bf16.msra.mxu0 %v1739
    %2499 = vmatprep.subr.bf16.mxu0 %v1738
    %2500 = vmatpush2.bf16.msra.mxu0 %v1737
    %2501 = vmatprep.subr.bf16.mxu0 %v1736
    %2502 = vmatpush2.bf16.msra.mxu0 %v1735
    %2503 = vmatprep.subr.bf16.mxu0 %v1734
    %2504 = vmatpush2.bf16.msra.mxu0 %v1733
    %2505 = vmatprep.subr.bf16.mxu0 %v1732
    %2506 = vmatpush2.bf16.msra.mxu0 %v1731
    %2507 = vmatprep.subr.bf16.mxu0 %v1730
    %2508 = vmatpush2.bf16.msra.mxu0 %v1729
    %2509 = vmatprep.subr.bf16.mxu0 %v1728
    %2510 = vmatpush2.bf16.msra.mxu0 %v1727
    %2511 = vmatprep.mubr.bf16.mxu0 %v140
    %2512 = vmatmul.mubr.bf16.gmra.mxu0 %v139
    %v2513 = vpop.f32.mrf.mxu0
    %v2514 = vadd.f32 %v552, %v2513
    %v2515 = vpop.f32.mrf.mxu0
    %v2516 = vadd.f32 %v556, %v2515
    %v2517 = vpop.f32.mrf.mxu0
    %v2518 = vpop.f32.mrf.mxu0
    %2519 = vdwg.mxu0
    %2520 = vmatprep.subr.bf16.mxu0 %v1758
    %2521 = vmatpush1.bf16.msra.mxu0 %v1757
    %2522 = vmatprep.subr.bf16.mxu0 %v1756
    %2523 = vmatpush1.bf16.msra.mxu0 %v1755
    %2524 = vmatprep.subr.bf16.mxu0 %v1754
    %2525 = vmatpush1.bf16.msra.mxu0 %v1753
    %2526 = vmatprep.subr.bf16.mxu0 %v1752
    %2527 = vmatpush1.bf16.msra.mxu0 %v1751
    %2528 = vmatprep.subr.bf16.mxu0 %v1750
    %2529 = vmatpush1.bf16.msra.mxu0 %v1749
    %2530 = vmatprep.subr.bf16.mxu0 %v1748
    %2531 = vmatpush1.bf16.msra.mxu0 %v1747
    %2532 = vmatprep.subr.bf16.mxu0 %v1746
    %2533 = vmatpush1.bf16.msra.mxu0 %v1745
    %2534 = vmatprep.subr.bf16.mxu0 %v1744
    %2535 = vmatpush1.bf16.msra.mxu0 %v1743
    %2536 = vmatprep.subr.bf16.mxu0 %v1774
    %2537 = vmatpush2.bf16.msra.mxu0 %v1773
    %2538 = vmatprep.subr.bf16.mxu0 %v1772
    %2539 = vmatpush2.bf16.msra.mxu0 %v1771
    %2540 = vmatprep.subr.bf16.mxu0 %v1770
    %2541 = vmatpush2.bf16.msra.mxu0 %v1769
    %2542 = vmatprep.subr.bf16.mxu0 %v1768
    %2543 = vmatpush2.bf16.msra.mxu0 %v1767
    %2544 = vmatprep.subr.bf16.mxu0 %v1766
    %2545 = vmatpush2.bf16.msra.mxu0 %v1765
    %2546 = vmatprep.subr.bf16.mxu0 %v1764
    %2547 = vmatpush2.bf16.msra.mxu0 %v1763
    %2548 = vmatprep.subr.bf16.mxu0 %v1762
    %2549 = vmatpush2.bf16.msra.mxu0 %v1761
    %2550 = vmatprep.subr.bf16.mxu0 %v1760
    %2551 = vmatpush2.bf16.msra.mxu0 %v1759
    %2552 = vmatprep.mubr.bf16.mxu0 %v142
    %2553 = vmatmul.mubr.bf16.gmra.mxu0 %v141
    %v2554 = vpop.f32.mrf.mxu0
    %v2555 = vadd.f32 %v2514, %v2554
    %v2556 = vpop.f32.mrf.mxu0
    %v2557 = vadd.f32 %v2516, %v2556
    %v2558 = vpop.f32.mrf.mxu0
    %v2559 = vpop.f32.mrf.mxu0
    %2560 = vdwg.mxu0
    %2561 = vmatprep.subr.bf16.mxu0 %v1790
    %2562 = vmatpush1.bf16.msra.mxu0 %v1789
    %2563 = vmatprep.subr.bf16.mxu0 %v1788
    %2564 = vmatpush1.bf16.msra.mxu0 %v1787
    %2565 = vmatprep.subr.bf16.mxu0 %v1786
    %2566 = vmatpush1.bf16.msra.mxu0 %v1785
    %2567 = vmatprep.subr.bf16.mxu0 %v1784
    %2568 = vmatpush1.bf16.msra.mxu0 %v1783
    %2569 = vmatprep.subr.bf16.mxu0 %v1782
    %2570 = vmatpush1.bf16.msra.mxu0 %v1781
    %2571 = vmatprep.subr.bf16.mxu0 %v1780
    %2572 = vmatpush1.bf16.msra.mxu0 %v1779
    %2573 = vmatprep.subr.bf16.mxu0 %v1778
    %2574 = vmatpush1.bf16.msra.mxu0 %v1777
    %2575 = vmatprep.subr.bf16.mxu0 %v1776
    %2576 = vmatpush1.bf16.msra.mxu0 %v1775
    %2577 = vmatprep.subr.bf16.mxu0 %v1806
    %2578 = vmatpush2.bf16.msra.mxu0 %v1805
    %2579 = vmatprep.subr.bf16.mxu0 %v1804
    %2580 = vmatpush2.bf16.msra.mxu0 %v1803
    %2581 = vmatprep.subr.bf16.mxu0 %v1802
    %2582 = vmatpush2.bf16.msra.mxu0 %v1801
    %2583 = vmatprep.subr.bf16.mxu0 %v1800
    %2584 = vmatpush2.bf16.msra.mxu0 %v1799
    %2585 = vmatprep.subr.bf16.mxu0 %v1798
    %2586 = vmatpush2.bf16.msra.mxu0 %v1797
    %2587 = vmatprep.subr.bf16.mxu0 %v1796
    %2588 = vmatpush2.bf16.msra.mxu0 %v1795
    %2589 = vmatprep.subr.bf16.mxu0 %v1794
    %2590 = vmatpush2.bf16.msra.mxu0 %v1793
    %2591 = vmatprep.subr.bf16.mxu0 %v1792
    %2592 = vmatpush2.bf16.msra.mxu0 %v1791
    %2593 = vmatprep.mubr.bf16.mxu0 %v144
    %2594 = vmatmul.mubr.bf16.gmra.mxu0 %v143
    %v2595 = vpop.f32.mrf.mxu0
    %v2596 = vadd.f32 %v2555, %v2595
    %v2597 = vpop.f32.mrf.mxu0
    %v2598 = vadd.f32 %v2557, %v2597
    %v2599 = vpop.f32.mrf.mxu0
    %v2600 = vpop.f32.mrf.mxu0
    %2601 = vdwg.mxu0
    %2602 = vmatprep.subr.bf16.mxu0 %v1822
    %2603 = vmatpush1.bf16.msra.mxu0 %v1821
    %2604 = vmatprep.subr.bf16.mxu0 %v1820
    %2605 = vmatpush1.bf16.msra.mxu0 %v1819
    %2606 = vmatprep.subr.bf16.mxu0 %v1818
    %2607 = vmatpush1.bf16.msra.mxu0 %v1817
    %2608 = vmatprep.subr.bf16.mxu0 %v1816
    %2609 = vmatpush1.bf16.msra.mxu0 %v1815
    %2610 = vmatprep.subr.bf16.mxu0 %v1814
    %2611 = vmatpush1.bf16.msra.mxu0 %v1813
    %2612 = vmatprep.subr.bf16.mxu0 %v1812
    %2613 = vmatpush1.bf16.msra.mxu0 %v1811
    %2614 = vmatprep.subr.bf16.mxu0 %v1810
    %2615 = vmatpush1.bf16.msra.mxu0 %v1809
    %2616 = vmatprep.subr.bf16.mxu0 %v1808
    %2617 = vmatpush1.bf16.msra.mxu0 %v1807
    %2618 = vmatprep.subr.bf16.mxu0 %v1838
    %2619 = vmatpush2.bf16.msra.mxu0 %v1837
    %2620 = vmatprep.subr.bf16.mxu0 %v1836
    %2621 = vmatpush2.bf16.msra.mxu0 %v1835
    %2622 = vmatprep.subr.bf16.mxu0 %v1834
    %2623 = vmatpush2.bf16.msra.mxu0 %v1833
    %2624 = vmatprep.subr.bf16.mxu0 %v1832
    %2625 = vmatpush2.bf16.msra.mxu0 %v1831
    %2626 = vmatprep.subr.bf16.mxu0 %v1830
    %2627 = vmatpush2.bf16.msra.mxu0 %v1829
    %2628 = vmatprep.subr.bf16.mxu0 %v1828
    %2629 = vmatpush2.bf16.msra.mxu0 %v1827
    %2630 = vmatprep.subr.bf16.mxu0 %v1826
    %2631 = vmatpush2.bf16.msra.mxu0 %v1825
    %2632 = vmatprep.subr.bf16.mxu0 %v1824
    %2633 = vmatpush2.bf16.msra.mxu0 %v1823
    %2634 = vmatprep.mubr.bf16.mxu0 %v146
    %2635 = vmatmul.mubr.bf16.gmra.mxu0 %v145
    %v2636 = vpop.f32.mrf.mxu0
    %v2637 = vadd.f32 %v2596, %v2636
    %v2638 = vpop.f32.mrf.mxu0
    %v2639 = vadd.f32 %v2598, %v2638
    %v2640 = vpop.f32.mrf.mxu0
    %v2641 = vpop.f32.mrf.mxu0
    %2642 = vdwg.mxu0
    %2643 = vmatprep.subr.bf16.mxu0 %v1854
    %2644 = vmatpush1.bf16.msra.mxu0 %v1853
    %2645 = vmatprep.subr.bf16.mxu0 %v1852
    %2646 = vmatpush1.bf16.msra.mxu0 %v1851
    %2647 = vmatprep.subr.bf16.mxu0 %v1850
    %2648 = vmatpush1.bf16.msra.mxu0 %v1849
    %2649 = vmatprep.subr.bf16.mxu0 %v1848
    %2650 = vmatpush1.bf16.msra.mxu0 %v1847
    %2651 = vmatprep.subr.bf16.mxu0 %v1846
    %2652 = vmatpush1.bf16.msra.mxu0 %v1845
    %2653 = vmatprep.subr.bf16.mxu0 %v1844
    %2654 = vmatpush1.bf16.msra.mxu0 %v1843
    %2655 = vmatprep.subr.bf16.mxu0 %v1842
    %2656 = vmatpush1.bf16.msra.mxu0 %v1841
    %2657 = vmatprep.subr.bf16.mxu0 %v1840
    %2658 = vmatpush1.bf16.msra.mxu0 %v1839
    %2659 = vmatprep.subr.bf16.mxu0 %v1870
    %2660 = vmatpush2.bf16.msra.mxu0 %v1869
    %2661 = vmatprep.subr.bf16.mxu0 %v1868
    %2662 = vmatpush2.bf16.msra.mxu0 %v1867
    %2663 = vmatprep.subr.bf16.mxu0 %v1866
    %2664 = vmatpush2.bf16.msra.mxu0 %v1865
    %2665 = vmatprep.subr.bf16.mxu0 %v1864
    %2666 = vmatpush2.bf16.msra.mxu0 %v1863
    %2667 = vmatprep.subr.bf16.mxu0 %v1862
    %2668 = vmatpush2.bf16.msra.mxu0 %v1861
    %2669 = vmatprep.subr.bf16.mxu0 %v1860
    %2670 = vmatpush2.bf16.msra.mxu0 %v1859
    %2671 = vmatprep.subr.bf16.mxu0 %v1858
    %2672 = vmatpush2.bf16.msra.mxu0 %v1857
    %2673 = vmatprep.subr.bf16.mxu0 %v1856
    %2674 = vmatpush2.bf16.msra.mxu0 %v1855
    %2675 = vmatprep.mubr.bf16.mxu0 %v148
    %2676 = vmatmul.mubr.bf16.gmra.mxu0 %v147
    %v2677 = vpop.f32.mrf.mxu0
    %v2678 = vadd.f32 %v2637, %v2677
    %v2679 = vpop.f32.mrf.mxu0
    %v2680 = vadd.f32 %v2639, %v2679
    %v2681 = vpop.f32.mrf.mxu0
    %v2682 = vpop.f32.mrf.mxu0
    %2683 = vdwg.mxu0
    %2684 = vmatprep.subr.bf16.mxu0 %v1886
    %2685 = vmatpush1.bf16.msra.mxu0 %v1885
    %2686 = vmatprep.subr.bf16.mxu0 %v1884
    %2687 = vmatpush1.bf16.msra.mxu0 %v1883
    %2688 = vmatprep.subr.bf16.mxu0 %v1882
    %2689 = vmatpush1.bf16.msra.mxu0 %v1881
    %2690 = vmatprep.subr.bf16.mxu0 %v1880
    %2691 = vmatpush1.bf16.msra.mxu0 %v1879
    %2692 = vmatprep.subr.bf16.mxu0 %v1878
    %2693 = vmatpush1.bf16.msra.mxu0 %v1877
    %2694 = vmatprep.subr.bf16.mxu0 %v1876
    %2695 = vmatpush1.bf16.msra.mxu0 %v1875
    %2696 = vmatprep.subr.bf16.mxu0 %v1874
    %2697 = vmatpush1.bf16.msra.mxu0 %v1873
    %2698 = vmatprep.subr.bf16.mxu0 %v1872
    %2699 = vmatpush1.bf16.msra.mxu0 %v1871
    %2700 = vmatprep.subr.bf16.mxu0 %v1902
    %2701 = vmatpush2.bf16.msra.mxu0 %v1901
    %2702 = vmatprep.subr.bf16.mxu0 %v1900
    %2703 = vmatpush2.bf16.msra.mxu0 %v1899
    %2704 = vmatprep.subr.bf16.mxu0 %v1898
    %2705 = vmatpush2.bf16.msra.mxu0 %v1897
    %2706 = vmatprep.subr.bf16.mxu0 %v1896
    %2707 = vmatpush2.bf16.msra.mxu0 %v1895
    %2708 = vmatprep.subr.bf16.mxu0 %v1894
    %2709 = vmatpush2.bf16.msra.mxu0 %v1893
    %2710 = vmatprep.subr.bf16.mxu0 %v1892
    %2711 = vmatpush2.bf16.msra.mxu0 %v1891
    %2712 = vmatprep.subr.bf16.mxu0 %v1890
    %2713 = vmatpush2.bf16.msra.mxu0 %v1889
    %2714 = vmatprep.subr.bf16.mxu0 %v1888
    %2715 = vmatpush2.bf16.msra.mxu0 %v1887
    %2716 = vmatprep.mubr.bf16.mxu0 %v150
    %2717 = vmatmul.mubr.bf16.gmra.mxu0 %v149
    %v2718 = vpop.f32.mrf.mxu0
    %v2719 = vadd.f32 %v2678, %v2718
    %v2720 = vpop.f32.mrf.mxu0
    %v2721 = vadd.f32 %v2680, %v2720
    %v2722 = vpop.f32.mrf.mxu0
    %v2723 = vpop.f32.mrf.mxu0
    %2724 = vdwg.mxu0
    %2725 = vmatprep.subr.bf16.mxu0 %v1918
    %2726 = vmatpush1.bf16.msra.mxu0 %v1917
    %2727 = vmatprep.subr.bf16.mxu0 %v1916
    %2728 = vmatpush1.bf16.msra.mxu0 %v1915
    %2729 = vmatprep.subr.bf16.mxu0 %v1914
    %2730 = vmatpush1.bf16.msra.mxu0 %v1913
    %2731 = vmatprep.subr.bf16.mxu0 %v1912
    %2732 = vmatpush1.bf16.msra.mxu0 %v1911
    %2733 = vmatprep.subr.bf16.mxu0 %v1910
    %2734 = vmatpush1.bf16.msra.mxu0 %v1909
    %2735 = vmatprep.subr.bf16.mxu0 %v1908
    %2736 = vmatpush1.bf16.msra.mxu0 %v1907
    %2737 = vmatprep.subr.bf16.mxu0 %v1906
    %2738 = vmatpush1.bf16.msra.mxu0 %v1905
    %2739 = vmatprep.subr.bf16.mxu0 %v1904
    %2740 = vmatpush1.bf16.msra.mxu0 %v1903
    %2741 = vmatprep.subr.bf16.mxu0 %v1934
    %2742 = vmatpush2.bf16.msra.mxu0 %v1933
    %2743 = vmatprep.subr.bf16.mxu0 %v1932
    %2744 = vmatpush2.bf16.msra.mxu0 %v1931
    %2745 = vmatprep.subr.bf16.mxu0 %v1930
    %2746 = vmatpush2.bf16.msra.mxu0 %v1929
    %2747 = vmatprep.subr.bf16.mxu0 %v1928
    %2748 = vmatpush2.bf16.msra.mxu0 %v1927
    %2749 = vmatprep.subr.bf16.mxu0 %v1926
    %2750 = vmatpush2.bf16.msra.mxu0 %v1925
    %2751 = vmatprep.subr.bf16.mxu0 %v1924
    %2752 = vmatpush2.bf16.msra.mxu0 %v1923
    %2753 = vmatprep.subr.bf16.mxu0 %v1922
    %2754 = vmatpush2.bf16.msra.mxu0 %v1921
    %2755 = vmatprep.subr.bf16.mxu0 %v1920
    %2756 = vmatpush2.bf16.msra.mxu0 %v1919
    %2757 = vmatprep.mubr.bf16.mxu0 %v152
    %2758 = vmatmul.mubr.bf16.gmra.mxu0 %v151
    %v2759 = vpop.f32.mrf.mxu0
    %v2760 = vadd.f32 %v2719, %v2759
    %v2761 = vpop.f32.mrf.mxu0
    %v2762 = vadd.f32 %v2721, %v2761
    %v2763 = vpop.f32.mrf.mxu0
    %v2764 = vpop.f32.mrf.mxu0
    %2765 = vdwg.mxu0
    %2766 = vmatprep.subr.bf16.mxu0 %v1950
    %2767 = vmatpush1.bf16.msra.mxu0 %v1949
    %2768 = vmatprep.subr.bf16.mxu0 %v1948
    %2769 = vmatpush1.bf16.msra.mxu0 %v1947
    %2770 = vmatprep.subr.bf16.mxu0 %v1946
    %2771 = vmatpush1.bf16.msra.mxu0 %v1945
    %2772 = vmatprep.subr.bf16.mxu0 %v1944
    %2773 = vmatpush1.bf16.msra.mxu0 %v1943
    %2774 = vmatprep.subr.bf16.mxu0 %v1942
    %2775 = vmatpush1.bf16.msra.mxu0 %v1941
    %2776 = vmatprep.subr.bf16.mxu0 %v1940
    %2777 = vmatpush1.bf16.msra.mxu0 %v1939
    %2778 = vmatprep.subr.bf16.mxu0 %v1938
    %2779 = vmatpush1.bf16.msra.mxu0 %v1937
    %2780 = vmatprep.subr.bf16.mxu0 %v1936
    %2781 = vmatpush1.bf16.msra.mxu0 %v1935
    %2782 = vmatprep.subr.bf16.mxu0 %v1966
    %2783 = vmatpush2.bf16.msra.mxu0 %v1965
    %2784 = vmatprep.subr.bf16.mxu0 %v1964
    %2785 = vmatpush2.bf16.msra.mxu0 %v1963
    %2786 = vmatprep.subr.bf16.mxu0 %v1962
    %2787 = vmatpush2.bf16.msra.mxu0 %v1961
    %2788 = vmatprep.subr.bf16.mxu0 %v1960
    %2789 = vmatpush2.bf16.msra.mxu0 %v1959
    %2790 = vmatprep.subr.bf16.mxu0 %v1958
    %2791 = vmatpush2.bf16.msra.mxu0 %v1957
    %2792 = vmatprep.subr.bf16.mxu0 %v1956
    %2793 = vmatpush2.bf16.msra.mxu0 %v1955
    %2794 = vmatprep.subr.bf16.mxu0 %v1954
    %2795 = vmatpush2.bf16.msra.mxu0 %v1953
    %2796 = vmatprep.subr.bf16.mxu0 %v1952
    %2797 = vmatpush2.bf16.msra.mxu0 %v1951
    %2798 = vmatprep.mubr.bf16.mxu0 %v154
    %2799 = vmatmul.mubr.bf16.gmra.mxu0 %v153
    %v2800 = vpop.f32.mrf.mxu0
    %v2801 = vadd.f32 %v2760, %v2800
    %v2802 = vpop.f32.mrf.mxu0
    %v2803 = vadd.f32 %v2762, %v2802
    %v2804 = vpop.f32.mrf.mxu0
    %v2805 = vpop.f32.mrf.mxu0
    %2806 = vdwg.mxu0
    %2807 = vmatprep.subr.bf16.mxu0 %v1982
    %2808 = vmatpush1.bf16.msra.mxu0 %v1981
    %2809 = vmatprep.subr.bf16.mxu0 %v1980
    %2810 = vmatpush1.bf16.msra.mxu0 %v1979
    %2811 = vmatprep.subr.bf16.mxu0 %v1978
    %2812 = vmatpush1.bf16.msra.mxu0 %v1977
    %2813 = vmatprep.subr.bf16.mxu0 %v1976
    %2814 = vmatpush1.bf16.msra.mxu0 %v1975
    %2815 = vmatprep.subr.bf16.mxu0 %v1974
    %2816 = vmatpush1.bf16.msra.mxu0 %v1973
    %2817 = vmatprep.subr.bf16.mxu0 %v1972
    %2818 = vmatpush1.bf16.msra.mxu0 %v1971
    %2819 = vmatprep.subr.bf16.mxu0 %v1970
    %2820 = vmatpush1.bf16.msra.mxu0 %v1969
    %2821 = vmatprep.subr.bf16.mxu0 %v1968
    %2822 = vmatpush1.bf16.msra.mxu0 %v1967
    %2823 = vmatprep.subr.bf16.mxu0 %v1998
    %2824 = vmatpush2.bf16.msra.mxu0 %v1997
    %2825 = vmatprep.subr.bf16.mxu0 %v1996
    %2826 = vmatpush2.bf16.msra.mxu0 %v1995
    %2827 = vmatprep.subr.bf16.mxu0 %v1994
    %2828 = vmatpush2.bf16.msra.mxu0 %v1993
    %2829 = vmatprep.subr.bf16.mxu0 %v1992
    %2830 = vmatpush2.bf16.msra.mxu0 %v1991
    %2831 = vmatprep.subr.bf16.mxu0 %v1990
    %2832 = vmatpush2.bf16.msra.mxu0 %v1989
    %2833 = vmatprep.subr.bf16.mxu0 %v1988
    %2834 = vmatpush2.bf16.msra.mxu0 %v1987
    %2835 = vmatprep.subr.bf16.mxu0 %v1986
    %2836 = vmatpush2.bf16.msra.mxu0 %v1985
    %2837 = vmatprep.subr.bf16.mxu0 %v1984
    %2838 = vmatpush2.bf16.msra.mxu0 %v1983
    %2839 = vmatprep.mubr.bf16.mxu0 %v156
    %2840 = vmatmul.mubr.bf16.gmra.mxu0 %v155
    %v2841 = vpop.f32.mrf.mxu0
    %v2842 = vadd.f32 %v2801, %v2841
    %v2843 = vpop.f32.mrf.mxu0
    %v2844 = vadd.f32 %v2803, %v2843
    %v2845 = vpop.f32.mrf.mxu0
    %v2846 = vpop.f32.mrf.mxu0
    %2847 = vdwg.mxu0
    %2848 = vmatprep.subr.bf16.mxu0 %v2014
    %2849 = vmatpush1.bf16.msra.mxu0 %v2013
    %2850 = vmatprep.subr.bf16.mxu0 %v2012
    %2851 = vmatpush1.bf16.msra.mxu0 %v2011
    %2852 = vmatprep.subr.bf16.mxu0 %v2010
    %2853 = vmatpush1.bf16.msra.mxu0 %v2009
    %2854 = vmatprep.subr.bf16.mxu0 %v2008
    %2855 = vmatpush1.bf16.msra.mxu0 %v2007
    %2856 = vmatprep.subr.bf16.mxu0 %v2006
    %2857 = vmatpush1.bf16.msra.mxu0 %v2005
    %2858 = vmatprep.subr.bf16.mxu0 %v2004
    %2859 = vmatpush1.bf16.msra.mxu0 %v2003
    %2860 = vmatprep.subr.bf16.mxu0 %v2002
    %2861 = vmatpush1.bf16.msra.mxu0 %v2001
    %2862 = vmatprep.subr.bf16.mxu0 %v2000
    %2863 = vmatpush1.bf16.msra.mxu0 %v1999
    %2864 = vmatprep.subr.bf16.mxu0 %v2030
    %2865 = vmatpush2.bf16.msra.mxu0 %v2029
    %2866 = vmatprep.subr.bf16.mxu0 %v2028
    %2867 = vmatpush2.bf16.msra.mxu0 %v2027
    %2868 = vmatprep.subr.bf16.mxu0 %v2026
    %2869 = vmatpush2.bf16.msra.mxu0 %v2025
    %2870 = vmatprep.subr.bf16.mxu0 %v2024
    %2871 = vmatpush2.bf16.msra.mxu0 %v2023
    %2872 = vmatprep.subr.bf16.mxu0 %v2022
    %2873 = vmatpush2.bf16.msra.mxu0 %v2021
    %2874 = vmatprep.subr.bf16.mxu0 %v2020
    %2875 = vmatpush2.bf16.msra.mxu0 %v2019
    %2876 = vmatprep.subr.bf16.mxu0 %v2018
    %2877 = vmatpush2.bf16.msra.mxu0 %v2017
    %2878 = vmatprep.subr.bf16.mxu0 %v2016
    %2879 = vmatpush2.bf16.msra.mxu0 %v2015
    %2880 = vmatprep.mubr.bf16.mxu0 %v158
    %2881 = vmatmul.mubr.bf16.gmra.mxu0 %v157
    %v2882 = vpop.f32.mrf.mxu0
    %v2883 = vadd.f32 %v2842, %v2882
    %v2884 = vpop.f32.mrf.mxu0
    %v2885 = vadd.f32 %v2844, %v2884
    %v2886 = vpop.f32.mrf.mxu0
    %v2887 = vpop.f32.mrf.mxu0
    %2888 = vdwg.mxu0
    %2889 = vmatprep.subr.bf16.mxu0 %v2046
    %2890 = vmatpush1.bf16.msra.mxu0 %v2045
    %2891 = vmatprep.subr.bf16.mxu0 %v2044
    %2892 = vmatpush1.bf16.msra.mxu0 %v2043
    %2893 = vmatprep.subr.bf16.mxu0 %v2042
    %2894 = vmatpush1.bf16.msra.mxu0 %v2041
    %2895 = vmatprep.subr.bf16.mxu0 %v2040
    %2896 = vmatpush1.bf16.msra.mxu0 %v2039
    %2897 = vmatprep.subr.bf16.mxu0 %v2038
    %2898 = vmatpush1.bf16.msra.mxu0 %v2037
    %2899 = vmatprep.subr.bf16.mxu0 %v2036
    %2900 = vmatpush1.bf16.msra.mxu0 %v2035
    %2901 = vmatprep.subr.bf16.mxu0 %v2034
    %2902 = vmatpush1.bf16.msra.mxu0 %v2033
    %2903 = vmatprep.subr.bf16.mxu0 %v2032
    %2904 = vmatpush1.bf16.msra.mxu0 %v2031
    %2905 = vmatprep.subr.bf16.mxu0 %v2062
    %2906 = vmatpush2.bf16.msra.mxu0 %v2061
    %2907 = vmatprep.subr.bf16.mxu0 %v2060
    %2908 = vmatpush2.bf16.msra.mxu0 %v2059
    %2909 = vmatprep.subr.bf16.mxu0 %v2058
    %2910 = vmatpush2.bf16.msra.mxu0 %v2057
    %2911 = vmatprep.subr.bf16.mxu0 %v2056
    %2912 = vmatpush2.bf16.msra.mxu0 %v2055
    %2913 = vmatprep.subr.bf16.mxu0 %v2054
    %2914 = vmatpush2.bf16.msra.mxu0 %v2053
    %2915 = vmatprep.subr.bf16.mxu0 %v2052
    %2916 = vmatpush2.bf16.msra.mxu0 %v2051
    %2917 = vmatprep.subr.bf16.mxu0 %v2050
    %2918 = vmatpush2.bf16.msra.mxu0 %v2049
    %2919 = vmatprep.subr.bf16.mxu0 %v2048
    %2920 = vmatpush2.bf16.msra.mxu0 %v2047
    %2921 = vmatprep.mubr.bf16.mxu0 %v160
    %2922 = vmatmul.mubr.bf16.gmra.mxu0 %v159
    %v2923 = vpop.f32.mrf.mxu0
    %v2924 = vadd.f32 %v2883, %v2923
    %v2925 = vpop.f32.mrf.mxu0
    %v2926 = vadd.f32 %v2885, %v2925
    %v2927 = vpop.f32.mrf.mxu0
    %v2928 = vpop.f32.mrf.mxu0
    %2929 = vdwg.mxu0
    %2930 = vmatprep.subr.bf16.mxu0 %v2078
    %2931 = vmatpush1.bf16.msra.mxu0 %v2077
    %2932 = vmatprep.subr.bf16.mxu0 %v2076
    %2933 = vmatpush1.bf16.msra.mxu0 %v2075
    %2934 = vmatprep.subr.bf16.mxu0 %v2074
    %2935 = vmatpush1.bf16.msra.mxu0 %v2073
    %2936 = vmatprep.subr.bf16.mxu0 %v2072
    %2937 = vmatpush1.bf16.msra.mxu0 %v2071
    %2938 = vmatprep.subr.bf16.mxu0 %v2070
    %2939 = vmatpush1.bf16.msra.mxu0 %v2069
    %2940 = vmatprep.subr.bf16.mxu0 %v2068
    %2941 = vmatpush1.bf16.msra.mxu0 %v2067
    %2942 = vmatprep.subr.bf16.mxu0 %v2066
    %2943 = vmatpush1.bf16.msra.mxu0 %v2065
    %2944 = vmatprep.subr.bf16.mxu0 %v2064
    %2945 = vmatpush1.bf16.msra.mxu0 %v2063
    %2946 = vmatprep.subr.bf16.mxu0 %v2094
    %2947 = vmatpush2.bf16.msra.mxu0 %v2093
    %2948 = vmatprep.subr.bf16.mxu0 %v2092
    %2949 = vmatpush2.bf16.msra.mxu0 %v2091
    %2950 = vmatprep.subr.bf16.mxu0 %v2090
    %2951 = vmatpush2.bf16.msra.mxu0 %v2089
    %2952 = vmatprep.subr.bf16.mxu0 %v2088
    %2953 = vmatpush2.bf16.msra.mxu0 %v2087
    %2954 = vmatprep.subr.bf16.mxu0 %v2086
    %2955 = vmatpush2.bf16.msra.mxu0 %v2085
    %2956 = vmatprep.subr.bf16.mxu0 %v2084
    %2957 = vmatpush2.bf16.msra.mxu0 %v2083
    %2958 = vmatprep.subr.bf16.mxu0 %v2082
    %2959 = vmatpush2.bf16.msra.mxu0 %v2081
    %2960 = vmatprep.subr.bf16.mxu0 %v2080
    %2961 = vmatpush2.bf16.msra.mxu0 %v2079
    %2962 = vmatprep.mubr.bf16.mxu0 %v162
    %2963 = vmatmul.mubr.bf16.gmra.mxu0 %v161
    %v2964 = vpop.f32.mrf.mxu0
    %v2965 = vadd.f32 %v2924, %v2964
    %v2966 = vpop.f32.mrf.mxu0
    %v2967 = vadd.f32 %v2926, %v2966
    %v2968 = vpop.f32.mrf.mxu0
    %v2969 = vpop.f32.mrf.mxu0
    %2970 = vdwg.mxu0
    %v2971 = vmax.f32 %v2965, 0.0
    %v2972 = vmax.f32 %v2967, 0.0
    %v2973 = vpack.c.bf16 %v2971, %v2971
    %v2974 = vpack.c.bf16 %v2972, %v2972
    %v2975 = vld [vmem:[#allocation8] sm:$0xff]
    %v2976 = vld [vmem:[#allocation8 + $0x8] sm:$0xff]
    %v2977 = vld [vmem:[#allocation8 + $0x10] sm:$0xff]
    %v2978 = vld [vmem:[#allocation8 + $0x18] sm:$0xff]
    %v2979 = vld [vmem:[#allocation8 + $0x20] sm:$0xff]
    %v2980 = vld [vmem:[#allocation8 + $0x28] sm:$0xff]
    %v2981 = vld [vmem:[#allocation8 + $0x30] sm:$0xff]
    %v2982 = vld [vmem:[#allocation8 + $0x38] sm:$0xff]
    %v2983 = vld [vmem:[#allocation8 + $0x40] sm:$0xff]
    %v2984 = vld [vmem:[#allocation8 + $0x48] sm:$0xff]
    %v2985 = vld [vmem:[#allocation8 + $0x50] sm:$0xff]
    %v2986 = vld [vmem:[#allocation8 + $0x58] sm:$0xff]
    %v2987 = vld [vmem:[#allocation8 + $0x60] sm:$0xff]
    %v2988 = vld [vmem:[#allocation8 + $0x68] sm:$0xff]
    %v2989 = vld [vmem:[#allocation8 + $0x70] sm:$0xff]
    %v2990 = vld [vmem:[#allocation8 + $0x78] sm:$0xff]
    %v2991 = vld [vmem:[#allocation8 + $0x80] sm:$0xff]
    %v2992 = vld [vmem:[#allocation8 + $0x88] sm:$0xff]
    %v2993 = vld [vmem:[#allocation8 + $0x90] sm:$0xff]
    %v2994 = vld [vmem:[#allocation8 + $0x98] sm:$0xff]
    %v2995 = vld [vmem:[#allocation8 + $0xa0] sm:$0xff]
    %v2996 = vld [vmem:[#allocation8 + $0xa8] sm:$0xff]
    %v2997 = vld [vmem:[#allocation8 + $0xb0] sm:$0xff]
    %v2998 = vld [vmem:[#allocation8 + $0xb8] sm:$0xff]
    %v2999 = vld [vmem:[#allocation8 + $0xc0] sm:$0xff]
    %v3000 = vld [vmem:[#allocation8 + $0xc8] sm:$0xff]
    %v3001 = vld [vmem:[#allocation8 + $0xd0] sm:$0xff]
    %v3002 = vld [vmem:[#allocation8 + $0xd8] sm:$0xff]
    %v3003 = vld [vmem:[#allocation8 + $0xe0] sm:$0xff]
    %v3004 = vld [vmem:[#allocation8 + $0xe8] sm:$0xff]
    %v3005 = vld [vmem:[#allocation8 + $0xf0] sm:$0xff]
    %v3006 = vld [vmem:[#allocation8 + $0xf8] sm:$0xff]
    %v3007 = vld [vmem:[#allocation10] sm:$0x3]
    %v3009 = vlaneseq
    %v3010 = vshrl.u32 %v3009, 7
    %v3011 = vsub.s32 0, %v3010
    %v3012 = vrot.slane %v3007, %v3011
    %v3013 = vlaneseq
    %v3014 = vshrl.u32 %v3013, 7
    %v3015 = vsub.s32 1, %v3014
    %v3016 = vrot.slane %v3007, %v3015
    %v3051 = vunpack.c.l.b16 %v2975
    %v3052 = vunpack.c.h.b16 %v2975
    %v3053 = vunpack.c.l.b16 %v2976
    %v3054 = vunpack.c.h.b16 %v2976
    %v3055 = vunpack.c.l.b16 %v2977
    %v3056 = vunpack.c.h.b16 %v2977
    %v3057 = vunpack.c.l.b16 %v2978
    %v3058 = vunpack.c.h.b16 %v2978
    %v3059 = vunpack.c.l.b16 %v2979
    %v3060 = vunpack.c.h.b16 %v2979
    %v3061 = vunpack.c.l.b16 %v2980
    %v3062 = vunpack.c.h.b16 %v2980
    %v3063 = vunpack.c.l.b16 %v2981
    %v3064 = vunpack.c.h.b16 %v2981
    %v3065 = vunpack.c.l.b16 %v2982
    %v3066 = vunpack.c.h.b16 %v2982
    %v3067 = vunpack.c.l.b16 %v2983
    %v3068 = vunpack.c.h.b16 %v2983
    %v3069 = vunpack.c.l.b16 %v2984
    %v3070 = vunpack.c.h.b16 %v2984
    %v3071 = vunpack.c.l.b16 %v2985
    %v3072 = vunpack.c.h.b16 %v2985
    %v3073 = vunpack.c.l.b16 %v2986
    %v3074 = vunpack.c.h.b16 %v2986
    %v3075 = vunpack.c.l.b16 %v2987
    %v3076 = vunpack.c.h.b16 %v2987
    %v3077 = vunpack.c.l.b16 %v2988
    %v3078 = vunpack.c.h.b16 %v2988
    %v3079 = vunpack.c.l.b16 %v2989
    %v3080 = vunpack.c.h.b16 %v2989
    %v3081 = vunpack.c.l.b16 %v2990
    %v3082 = vunpack.c.h.b16 %v2990
    %v3083 = vunpack.c.l.b16 %v2991
    %v3084 = vunpack.c.h.b16 %v2991
    %v3085 = vunpack.c.l.b16 %v2992
    %v3086 = vunpack.c.h.b16 %v2992
    %v3087 = vunpack.c.l.b16 %v2993
    %v3088 = vunpack.c.h.b16 %v2993
    %v3089 = vunpack.c.l.b16 %v2994
    %v3090 = vunpack.c.h.b16 %v2994
    %v3091 = vunpack.c.l.b16 %v2995
    %v3092 = vunpack.c.h.b16 %v2995
    %v3093 = vunpack.c.l.b16 %v2996
    %v3094 = vunpack.c.h.b16 %v2996
    %v3095 = vunpack.c.l.b16 %v2997
    %v3096 = vunpack.c.h.b16 %v2997
    %v3097 = vunpack.c.l.b16 %v2998
    %v3098 = vunpack.c.h.b16 %v2998
    %v3099 = vunpack.c.l.b16 %v2999
    %v3100 = vunpack.c.h.b16 %v2999
    %v3101 = vunpack.c.l.b16 %v3000
    %v3102 = vunpack.c.h.b16 %v3000
    %v3103 = vunpack.c.l.b16 %v3001
    %v3104 = vunpack.c.h.b16 %v3001
    %v3105 = vunpack.c.l.b16 %v3002
    %v3106 = vunpack.c.h.b16 %v3002
    %v3107 = vunpack.c.l.b16 %v3003
    %v3108 = vunpack.c.h.b16 %v3003
    %v3109 = vunpack.c.l.b16 %v3004
    %v3110 = vunpack.c.h.b16 %v3004
    %v3111 = vunpack.c.l.b16 %v3005
    %v3112 = vunpack.c.h.b16 %v3005
    %v3113 = vunpack.c.l.b16 %v3006
    %v3114 = vunpack.c.h.b16 %v3006
    %v3115 = vpack.c.b16 %v3053, %v3051
    %v3116 = vpack.c.b16 %v3054, %v3052
    %v3117 = vpack.c.b16 %v3057, %v3055
    %v3118 = vpack.c.b16 %v3058, %v3056
    %v3119 = vpack.c.b16 %v3061, %v3059
    %v3120 = vpack.c.b16 %v3062, %v3060
    %v3121 = vpack.c.b16 %v3065, %v3063
    %v3122 = vpack.c.b16 %v3066, %v3064
    %v3123 = vpack.c.b16 %v3069, %v3067
    %v3124 = vpack.c.b16 %v3070, %v3068
    %v3125 = vpack.c.b16 %v3073, %v3071
    %v3126 = vpack.c.b16 %v3074, %v3072
    %v3127 = vpack.c.b16 %v3077, %v3075
    %v3128 = vpack.c.b16 %v3078, %v3076
    %v3129 = vpack.c.b16 %v3081, %v3079
    %v3130 = vpack.c.b16 %v3082, %v3080
    %v3131 = vpack.c.b16 %v3085, %v3083
    %v3132 = vpack.c.b16 %v3086, %v3084
    %v3133 = vpack.c.b16 %v3089, %v3087
    %v3134 = vpack.c.b16 %v3090, %v3088
    %v3135 = vpack.c.b16 %v3093, %v3091
    %v3136 = vpack.c.b16 %v3094, %v3092
    %v3137 = vpack.c.b16 %v3097, %v3095
    %v3138 = vpack.c.b16 %v3098, %v3096
    %v3139 = vpack.c.b16 %v3101, %v3099
    %v3140 = vpack.c.b16 %v3102, %v3100
    %v3141 = vpack.c.b16 %v3105, %v3103
    %v3142 = vpack.c.b16 %v3106, %v3104
    %v3143 = vpack.c.b16 %v3109, %v3107
    %v3144 = vpack.c.b16 %v3110, %v3108
    %v3145 = vpack.c.b16 %v3113, %v3111
    %v3146 = vpack.c.b16 %v3114, %v3112
    %3179 = vmatprep.subr.bf16.mxu0 %v3130
    %3180 = vmatpush1.bf16.msra.mxu0 %v3129
    %3181 = vmatprep.subr.bf16.mxu0 %v3128
    %3182 = vmatpush1.bf16.msra.mxu0 %v3127
    %3183 = vmatprep.subr.bf16.mxu0 %v3126
    %3184 = vmatpush1.bf16.msra.mxu0 %v3125
    %3185 = vmatprep.subr.bf16.mxu0 %v3124
    %3186 = vmatpush1.bf16.msra.mxu0 %v3123
    %3187 = vmatprep.subr.bf16.mxu0 %v3122
    %3188 = vmatpush1.bf16.msra.mxu0 %v3121
    %3189 = vmatprep.subr.bf16.mxu0 %v3120
    %3190 = vmatpush1.bf16.msra.mxu0 %v3119
    %3191 = vmatprep.subr.bf16.mxu0 %v3118
    %3192 = vmatpush1.bf16.msra.mxu0 %v3117
    %3193 = vmatprep.subr.bf16.mxu0 %v3116
    %3194 = vmatpush1.bf16.msra.mxu0 %v3115
    %3195 = vmatprep.subr.bf16.mxu0 %v3146
    %3196 = vmatpush2.bf16.msra.mxu0 %v3145
    %3197 = vmatprep.subr.bf16.mxu0 %v3144
    %3198 = vmatpush2.bf16.msra.mxu0 %v3143
    %3199 = vmatprep.subr.bf16.mxu0 %v3142
    %3200 = vmatpush2.bf16.msra.mxu0 %v3141
    %3201 = vmatprep.subr.bf16.mxu0 %v3140
    %3202 = vmatpush2.bf16.msra.mxu0 %v3139
    %3203 = vmatprep.subr.bf16.mxu0 %v3138
    %3204 = vmatpush2.bf16.msra.mxu0 %v3137
    %3205 = vmatprep.subr.bf16.mxu0 %v3136
    %3206 = vmatpush2.bf16.msra.mxu0 %v3135
    %3207 = vmatprep.subr.bf16.mxu0 %v3134
    %3208 = vmatpush2.bf16.msra.mxu0 %v3133
    %3209 = vmatprep.subr.bf16.mxu0 %v3132
    %3210 = vmatpush2.bf16.msra.mxu0 %v3131
    %3211 = vmatprep.mubr.bf16.mxu0 %v2974
    %3212 = vmatmul.mubr.bf16.gmra.mxu0 %v2973
    %v3213 = vpop.f32.mrf.mxu0
    %v3214 = vadd.f32 %v3012, %v3213
    %v3215 = vpop.f32.mrf.mxu0
    %v3216 = vadd.f32 %v3016, %v3215
    %v3217 = vpop.f32.mrf.mxu0
    %v3218 = vpop.f32.mrf.mxu0
    %3219 = vdwg.mxu0
    %v3220 = vmax.f32 %v3214, 0.0
    %v3221 = vmax.f32 %v3216, 0.0
    %v3222 = vpack.c.bf16 %v3220, %v3220
    %v3223 = vpack.c.bf16 %v3221, %v3221
    %v3224 = vld [vmem:[#allocation11] sm:$0xf]
    %v3225 = vld [vmem:[#allocation11 + $0x4] sm:$0xf]
    %v3226 = vld [vmem:[#allocation11 + $0x8] sm:$0xf]
    %v3227 = vld [vmem:[#allocation11 + $0xc] sm:$0xf]
    %v3228 = vld [vmem:[#allocation11 + $0x10] sm:$0xf]
    %v3229 = vld [vmem:[#allocation11 + $0x14] sm:$0xf]
    %v3230 = vld [vmem:[#allocation11 + $0x18] sm:$0xf]
    %v3231 = vld [vmem:[#allocation11 + $0x1c] sm:$0xf]
    %v3232 = vld [vmem:[#allocation11 + $0x20] sm:$0xf]
    %v3233 = vld [vmem:[#allocation11 + $0x24] sm:$0xf]
    %v3234 = vld [vmem:[#allocation11 + $0x28] sm:$0xf]
    %v3235 = vld [vmem:[#allocation11 + $0x2c] sm:$0xf]
    %v3236 = vld [vmem:[#allocation11 + $0x30] sm:$0xf]
    %v3237 = vld [vmem:[#allocation11 + $0x34] sm:$0xf]
    %v3238 = vld [vmem:[#allocation11 + $0x38] sm:$0xf]
    %v3239 = vld [vmem:[#allocation11 + $0x3c] sm:$0xf]
    %v3240 = vld [vmem:[#allocation11 + $0x40] sm:$0xf]
    %v3241 = vld [vmem:[#allocation11 + $0x44] sm:$0xf]
    %v3242 = vld [vmem:[#allocation11 + $0x48] sm:$0xf]
    %v3243 = vld [vmem:[#allocation11 + $0x4c] sm:$0xf]
    %v3244 = vld [vmem:[#allocation11 + $0x50] sm:$0xf]
    %v3245 = vld [vmem:[#allocation11 + $0x54] sm:$0xf]
    %v3246 = vld [vmem:[#allocation11 + $0x58] sm:$0xf]
    %v3247 = vld [vmem:[#allocation11 + $0x5c] sm:$0xf]
    %v3248 = vld [vmem:[#allocation11 + $0x60] sm:$0xf]
    %v3249 = vld [vmem:[#allocation11 + $0x64] sm:$0xf]
    %v3250 = vld [vmem:[#allocation11 + $0x68] sm:$0xf]
    %v3251 = vld [vmem:[#allocation11 + $0x6c] sm:$0xf]
    %v3252 = vld [vmem:[#allocation11 + $0x70] sm:$0xf]
    %v3253 = vld [vmem:[#allocation11 + $0x74] sm:$0xf]
    %v3254 = vld [vmem:[#allocation11 + $0x78] sm:$0xf]
    %v3255 = vld [vmem:[#allocation11 + $0x7c] sm:$0xf]
    %v3256 = vld [vmem:[#allocation13] sm:$0x1]
    %v3258 = vlaneseq
    %v3259 = vshrl.u32 %v3258, 7
    %v3260 = vsub.s32 0, %v3259
    %v3261 = vrot.slane %v3256, %v3260
    %v3295 = vunpack.c.l.b16 %v3224
    %v3296 = vunpack.c.l.b16 %v3225
    %v3297 = vunpack.c.l.b16 %v3226
    %v3298 = vunpack.c.l.b16 %v3227
    %v3299 = vunpack.c.l.b16 %v3228
    %v3300 = vunpack.c.l.b16 %v3229
    %v3301 = vunpack.c.l.b16 %v3230
    %v3302 = vunpack.c.l.b16 %v3231
    %v3303 = vunpack.c.l.b16 %v3232
    %v3304 = vunpack.c.l.b16 %v3233
    %v3305 = vunpack.c.l.b16 %v3234
    %v3306 = vunpack.c.l.b16 %v3235
    %v3307 = vunpack.c.l.b16 %v3236
    %v3308 = vunpack.c.l.b16 %v3237
    %v3309 = vunpack.c.l.b16 %v3238
    %v3310 = vunpack.c.l.b16 %v3239
    %v3311 = vunpack.c.l.b16 %v3240
    %v3312 = vunpack.c.l.b16 %v3241
    %v3313 = vunpack.c.l.b16 %v3242
    %v3314 = vunpack.c.l.b16 %v3243
    %v3315 = vunpack.c.l.b16 %v3244
    %v3316 = vunpack.c.l.b16 %v3245
    %v3317 = vunpack.c.l.b16 %v3246
    %v3318 = vunpack.c.l.b16 %v3247
    %v3319 = vunpack.c.l.b16 %v3248
    %v3320 = vunpack.c.l.b16 %v3249
    %v3321 = vunpack.c.l.b16 %v3250
    %v3322 = vunpack.c.l.b16 %v3251
    %v3323 = vunpack.c.l.b16 %v3252
    %v3324 = vunpack.c.l.b16 %v3253
    %v3325 = vunpack.c.l.b16 %v3254
    %v3326 = vunpack.c.l.b16 %v3255
    %v3327 = vpack.c.b16 %v3296, %v3295
    %v3328 = vpack.c.b16 %v3298, %v3297
    %v3329 = vpack.c.b16 %v3300, %v3299
    %v3330 = vpack.c.b16 %v3302, %v3301
    %v3331 = vpack.c.b16 %v3304, %v3303
    %v3332 = vpack.c.b16 %v3306, %v3305
    %v3333 = vpack.c.b16 %v3308, %v3307
    %v3334 = vpack.c.b16 %v3310, %v3309
    %v3335 = vpack.c.b16 %v3312, %v3311
    %v3336 = vpack.c.b16 %v3314, %v3313
    %v3337 = vpack.c.b16 %v3316, %v3315
    %v3338 = vpack.c.b16 %v3318, %v3317
    %v3339 = vpack.c.b16 %v3320, %v3319
    %v3340 = vpack.c.b16 %v3322, %v3321
    %v3341 = vpack.c.b16 %v3324, %v3323
    %v3342 = vpack.c.b16 %v3326, %v3325
    %3359 = vmatprep.subr.bf16.mxu0 0
    %3360 = vmatpush1.bf16.msra.mxu0 %v3334
    %3361 = vmatprep.subr.bf16.mxu0 0
    %3362 = vmatpush1.bf16.msra.mxu0 %v3333
    %3363 = vmatprep.subr.bf16.mxu0 0
    %3364 = vmatpush1.bf16.msra.mxu0 %v3332
    %3365 = vmatprep.subr.bf16.mxu0 0
    %3366 = vmatpush1.bf16.msra.mxu0 %v3331
    %3367 = vmatprep.subr.bf16.mxu0 0
    %3368 = vmatpush1.bf16.msra.mxu0 %v3330
    %3369 = vmatprep.subr.bf16.mxu0 0
    %3370 = vmatpush1.bf16.msra.mxu0 %v3329
    %3371 = vmatprep.subr.bf16.mxu0 0
    %3372 = vmatpush1.bf16.msra.mxu0 %v3328
    %3373 = vmatprep.subr.bf16.mxu0 0
    %3374 = vmatpush1.bf16.msra.mxu0 %v3327
    %3375 = vmatprep.subr.bf16.mxu0 0
    %3376 = vmatpush2.bf16.msra.mxu0 %v3342
    %3377 = vmatprep.subr.bf16.mxu0 0
    %3378 = vmatpush2.bf16.msra.mxu0 %v3341
    %3379 = vmatprep.subr.bf16.mxu0 0
    %3380 = vmatpush2.bf16.msra.mxu0 %v3340
    %3381 = vmatprep.subr.bf16.mxu0 0
    %3382 = vmatpush2.bf16.msra.mxu0 %v3339
    %3383 = vmatprep.subr.bf16.mxu0 0
    %3384 = vmatpush2.bf16.msra.mxu0 %v3338
    %3385 = vmatprep.subr.bf16.mxu0 0
    %3386 = vmatpush2.bf16.msra.mxu0 %v3337
    %3387 = vmatprep.subr.bf16.mxu0 0
    %3388 = vmatpush2.bf16.msra.mxu0 %v3336
    %3389 = vmatprep.subr.bf16.mxu0 0
    %3390 = vmatpush2.bf16.msra.mxu0 %v3335
    %3391 = vmatprep.mubr.bf16.mxu0 %v3223
    %3392 = vmatmul.mubr.bf16.gmra.mxu0 %v3222
    %v3393 = vpop.f32.mrf.mxu0
    %v3394 = vadd.f32 %v3261, %v3393
    %v3395 = vpop.f32.mrf.mxu0
    %v3396 = vpop.f32.mrf.mxu0
    %v3397 = vpop.f32.mrf.mxu0
    %3398 = vdwg.mxu0
    %3399 = vmax.xlane.f32.xlu0 %v3394
    %v3400 = vpop.xlane.xlu0 %3399
    %v3401 = vsub.f32 %v3394, %v3400
    %v3402 = vmul.f32 %v3401, 1.442695
    %v3403 = vpow.pop %v3402
    %3404 = vadd.xlane.f32.xlu0 %v3403
    %v3405 = vpop.xlane.xlu0 %3404
    %v3406 = vlog2.pop %v3405
    %v3407 = vmul.f32 %v3406, 0.6931472
    %v3408 = vsub.f32 %v3401, %v3407
    %3409 = vst [vmem:[#allocation14] sm:$0xff] %v3408
    // Predicated region
    $region58: #{tpu_custom_call.1} parent=1 // pred_check
      _
    $region59: #{tpu_custom_call.1} parent=1 // pred_check_branch
      %3411 = sbr.rel (0) target = $region61
    $region60: #{tpu_custom_call.1} parent=1 // pred_region
      %s3413 = ssub.s32 128, 128
      %3414 = vsyncadd [#allocation4], %s3413
      %s3416 = sshll.u32 [#allocation14], 4
      %s3417 = int_to_ptr.vmem [resolvable:$true] %s3416
      %3419 = dma.vmem_to_hbm [thread:$0]  %s3417, 128, %s7, [#allocation4]
    $region61: #{tpu_custom_call.1} parent=1 // pred_fallthru
      _
    // Predicated region
    $region62: #{tpu_custom_call.1} parent=1 // pred_check
      _
    $region63: #{tpu_custom_call.1} parent=1 // pred_check_branch
      %3421 = sbr.rel (0) target = $region65
    $region64: #{tpu_custom_call.1} parent=1 // pred_region
      %3422 = dma.done [#allocation4], 128
    $region65: #{tpu_custom_call.1} parent=1 // pred_fallthru
      _
    %3423 = vsyncpa [#allocation3], 1
    %3424 = vsyncpa [#allocation6], 1
    %3425 = vsyncpa [#allocation9], 1
    %3426 = vsyncpa [#allocation12], 1
    %3427 = vsyncpa [#allocation4], 1

</llo_original>
